<compile_context>
chip_gen: v7x
topology: tpu7x:2x2x1
jax: 0.10.0
libtpu: 0.0.40
codegen_flags: <defaults>
</compile_context>

<pallas_src>
import functools

import jax
import jax.numpy as jnp
from jax.experimental import pallas as pl
from jax.experimental.pallas import tpu as pltpu


def _round_up(x, m):
    return ((x + m - 1) // m) * m


def _pad2(x, rows, cols, dtype=None):
    dtype = x.dtype if dtype is None else dtype
    out = jnp.zeros((rows, cols), dtype)
    return out.at[: x.shape[0], : x.shape[1]].set(x.astype(dtype))


def _pad_fc(wfc, f_in, n_kernels, f_out, fin_pad, f_pad):
    # (F_in, K*F_out) -> zero-pad each per-kernel block -> (Fin_pad, K*F_pad), bf16.
    w = wfc.reshape(f_in, n_kernels, f_out)
    wp = jnp.zeros((fin_pad, n_kernels, f_pad), jnp.bfloat16)
    wp = wp.at[:f_in, :, :f_out].set(w.astype(jnp.bfloat16))
    return wp.reshape(fin_pad, n_kernels * f_pad)


# ---------------------------------------------------------------------------
# Kernels
# ---------------------------------------------------------------------------

def _pseudo_weight_kernel(pseudo_ref, wp_ref, bp_ref, mu_ref, isig_ref, out_ref,
                          *, n_kernels, f_pad):
    # (tE, 2) @ (2, dim) + (1, dim) -> tanh -> (tE, dim)
    p = jnp.tanh(
        jnp.dot(pseudo_ref[...], wp_ref[...], preferred_element_type=jnp.float32)
        + bp_ref[...])
    te = p.shape[0]
    cols = []
    for k in range(n_kernels):  # static, tiny loop over mixture kernels
        diff = (p - mu_ref[k, :]) * isig_ref[k, :]
        wk = jnp.exp(-0.5 * jnp.sum(diff * diff, axis=-1, keepdims=True))  # (tE, 1)
        cols.append(jnp.broadcast_to(wk, (te, f_pad)))
    out_ref[...] = jnp.concatenate(cols, axis=1)  # (tE, K*F_pad), lane-dense


def _fc_kernel(x_ref, w_ref, out_ref, *, apply_relu):
    x = x_ref[...]
    if apply_relu:
        # TODO(synk): nn.Dropout(0.5) is training-mode only; identity in eval.
        x = jnp.maximum(x, 0.0)
    out_ref[...] = jnp.dot(x.astype(jnp.bfloat16), w_ref[...],
                           preferred_element_type=jnp.float32).astype(out_ref.dtype)


def _aggregate_kernel(a_ref, s_ref, h_ref, wrep_ref, bias_ref, out_ref, acc_ref,
                      *, n_kernels, f_pad, valid_cols, apply_log_softmax):
    e = pl.program_id(1)

    @pl.when(e == 0)
    def _():
        acc_ref[...] = jnp.zeros_like(acc_ref)

    # Gather source-node features for this edge tile: (tE, N) @ (N, K*Fp) -> f32.
    hs = jnp.dot(s_ref[...], h_ref[...], preferred_element_type=jnp.float32)
    # Weight all K mixture kernels at once (W_rep is pre-broadcast to K*Fp lanes).
    msg = (hs * wrep_ref[...]).astype(jnp.bfloat16)
    # Mean aggregation: one wide bf16 MXU matmul, f32 accumulate.
    acc_ref[...] += jnp.dot(a_ref[...], msg, preferred_element_type=jnp.float32)

    @pl.when(e == pl.num_programs(1) - 1)
    def _():
        acc = acc_ref[...]
        total = acc[:, 0:f_pad]
        for k in range(1, n_kernels):   # lane-aligned static slices, summed on VPU
            total = total + acc[:, k * f_pad:(k + 1) * f_pad]
        out = total + bias_ref[...]
        if apply_log_softmax:
            col = jax.lax.broadcasted_iota(jnp.int32, out.shape, 1)
            valid = col < valid_cols                     # mask padded classes
            z = jnp.where(valid, out, jnp.float32(-1e30))
            m = jnp.max(z, axis=-1, keepdims=True)
            zs = z - m
            ez = jnp.where(valid, jnp.exp(zs), 0.0)
            lse = jnp.log(jnp.sum(ez, axis=-1, keepdims=True))
            out = jnp.where(valid, zs - lse, 0.0)
        out_ref[...] = out.astype(out_ref.dtype)


# ---------------------------------------------------------------------------
# Pallas-call wrappers
# ---------------------------------------------------------------------------

def _pseudo_weights(pseudo_p, wp, bp, mu, isig, *, n_kernels, dim, f_pad,
                    e_pad, te):
    kfp = n_kernels * f_pad
    return pl.pallas_call(
        functools.partial(_pseudo_weight_kernel, n_kernels=n_kernels, f_pad=f_pad),
        out_shape=jax.ShapeDtypeStruct((e_pad, kfp), jnp.float32),
        grid_spec=pltpu.PrefetchScalarGridSpec(
            num_scalar_prefetch=0,
            grid=(e_pad // te,),
            in_specs=[
                pl.BlockSpec((te, pseudo_p.shape[1]), lambda e: (e, 0)),
                pl.BlockSpec((wp.shape[0], dim), lambda e: (0, 0)),
                pl.BlockSpec((1, dim), lambda e: (0, 0)),
                pl.BlockSpec((n_kernels, dim), lambda e: (0, 0)),
                pl.BlockSpec((n_kernels, dim), lambda e: (0, 0)),
            ],
            out_specs=pl.BlockSpec((te, kfp), lambda e: (e, 0))),
        compiler_params=pltpu.CompilerParams(dimension_semantics=("parallel",)),
    )(pseudo_p, wp, bp, mu, isig)


def _fc(x_pad, wfc_pad, *, n_pad, tn, fin_pad, kfp, apply_relu):
    return pl.pallas_call(
        functools.partial(_fc_kernel, apply_relu=apply_relu),
        out_shape=jax.ShapeDtypeStruct((n_pad, kfp), jnp.bfloat16),
        grid_spec=pltpu.PrefetchScalarGridSpec(
            num_scalar_prefetch=0,
            grid=(n_pad // tn,),
            in_specs=[pl.BlockSpec((tn, fin_pad), lambda i: (i, 0)),
                      pl.BlockSpec((fin_pad, kfp), lambda i: (0, 0))],
            out_specs=pl.BlockSpec((tn, kfp), lambda i: (i, 0))),
        compiler_params=pltpu.CompilerParams(dimension_semantics=("parallel",)),
    )(x_pad, wfc_pad)


def gmm_layer(x_pad, wfc_pad, wrep, s_p, a_p, bias_pad, *, n_kernels, f_pad,
              valid_cols, tn, te, n_pad, e_pad, fin_pad, apply_relu,
              apply_log_softmax):
    kfp = n_kernels * f_pad
    h = _fc(x_pad, wfc_pad, n_pad=n_pad, tn=tn, fin_pad=fin_pad, kfp=kfp,
            apply_relu=apply_relu)
    return pl.pallas_call(
        functools.partial(_aggregate_kernel, n_kernels=n_kernels, f_pad=f_pad,
                          valid_cols=valid_cols,
                          apply_log_softmax=apply_log_softmax),
        out_shape=jax.ShapeDtypeStruct((n_pad, f_pad), jnp.float32),
        grid_spec=pltpu.PrefetchScalarGridSpec(
            num_scalar_prefetch=0,
            grid=(n_pad // tn, e_pad // te),       # edge (reduction) axis last
            in_specs=[
                pl.BlockSpec((tn, te), lambda i, e: (i, e)),       # A tile
                pl.BlockSpec((te, n_pad), lambda i, e: (e, 0)),    # S tile
                pl.BlockSpec((n_pad, kfp), lambda i, e: (0, 0)),   # H (resident)
                pl.BlockSpec((te, kfp), lambda i, e: (e, 0)),      # W_rep tile
                pl.BlockSpec((1, f_pad), lambda i, e: (0, 0)),     # bias
            ],
            out_specs=pl.BlockSpec((tn, f_pad), lambda i, e: (i, 0)),
            scratch_shapes=[pltpu.VMEM((tn, kfp), jnp.float32)]),
        compiler_params=pltpu.CompilerParams(
            dimension_semantics=("parallel", "arbitrary")),
    )(a_p, s_p, h, wrep, bias_pad)


def monet_forward(feat, pseudo, params, graph, *, dim, n_kernels, n_hidden,
                  out_feats, tile_n=256, tile_e=512):
    # tile_e=512 fits v5e/v6e (128 MiB VMEM) with bf16 S/A; on v7x (64 MiB per
    # TensorCore) halve tile_e (e.g. 256).
    S, A = graph
    n, in_feats = feat.shape
    n_edges = pseudo.shape[0]

    fin = _round_up(in_feats, 128)
    fp1 = _round_up(n_hidden, 128)
    fp2 = _round_up(out_feats, 128)

    tn = min(tile_n, _round_up(n, 8))
    te = min(tile_e, _round_up(n_edges, 128))
    n_pad = _round_up(n, tn)
    e_pad = _round_up(n_edges, te)

    feat_p = _pad2(feat, n_pad, fin, jnp.float32)
    pseudo_p = _pad2(pseudo, e_pad, pseudo.shape[1], jnp.float32)
    s_p = _pad2(S, e_pad, n_pad, jnp.bfloat16)
    a_p = _pad2(A, n_pad, e_pad, jnp.bfloat16)

    wfc1 = _pad_fc(params["wfc1"], in_feats, n_kernels, n_hidden, fin, fp1)
    wfc2 = _pad_fc(params["wfc2"], n_hidden, n_kernels, out_feats, fp1, fp2)
    bias1 = _pad2(params["bias1"], 1, fp1, jnp.float32)
    bias2 = _pad2(params["bias2"], 1, fp2, jnp.float32)

    wrep1 = _pseudo_weights(pseudo_p, params["wp1"], params["bp1"],
                            params["mu1"], params["isig1"],
                            n_kernels=n_kernels, dim=dim, f_pad=fp1,
                            e_pad=e_pad, te=te)
    wrep2 = _pseudo_weights(pseudo_p, params["wp2"], params["bp2"],
                            params["mu2"], params["isig2"],
                            n_kernels=n_kernels, dim=dim, f_pad=fp2,
                            e_pad=e_pad, te=te)

    h1 = gmm_layer(feat_p, wfc1, wrep1, s_p, a_p, bias1,
                   n_kernels=n_kernels, f_pad=fp1, valid_cols=n_hidden,
                   tn=tn, te=te, n_pad=n_pad, e_pad=e_pad, fin_pad=fin,
                   apply_relu=False, apply_log_softmax=False)
    h2 = gmm_layer(h1, wfc2, wrep2, s_p, a_p, bias2,
                   n_kernels=n_kernels, f_pad=fp2, valid_cols=out_feats,
                   tn=tn, te=te, n_pad=n_pad, e_pad=e_pad, fin_pad=fp1,
                   apply_relu=True, apply_log_softmax=True)
    return h2[:n, :out_feats]


# ---------------------------------------------------------------------------
# Pure-JAX reference
# ---------------------------------------------------------------------------

def _ref_layer(feat, wfc, pseudo, wp, bp, mu, isig, S, A, bias,
               n_kernels, out_feats, apply_relu, apply_log_softmax):
    x = jnp.maximum(feat, 0.0) if apply_relu else feat
    h = (x @ wfc).reshape(-1, n_kernels, out_feats)
    p = jnp.tanh(pseudo @ wp + bp)
    w = jnp.exp(-0.5 * jnp.sum(((p[:, None, :] - mu[None]) * isig[None]) ** 2, -1))
    hs = (S @ h.reshape(-1, n_kernels * out_feats)).reshape(-1, n_kernels, out_feats)
    m = hs * w[:, :, None]
    agg = jnp.einsum("ne,ekf->nkf", A, m)
    out = agg.sum(1) + bias
    if apply_log_softmax:
        out = jax.nn.log_softmax(out, axis=-1)
    return out


if __name__ == "__main__":
    # Small synthetic sizes consistent with the module's __init__.
    N, in_feats, n_hidden, out_feats, dim, n_kernels = 8, 4, 16, 4, 2, 3

    # Deterministic small graph: ring + skip-3 edges -> every node in-degree 2.
    src = jnp.concatenate([jnp.arange(N), jnp.arange(N)])
    dst = jnp.concatenate([(jnp.arange(N) + 1) % N, (jnp.arange(N) + 3) % N])
    E = int(src.shape[0])
    S = jax.nn.one_hot(src, N, dtype=jnp.float32)                  # (E, N)
    dst_oh = jax.nn.one_hot(dst, N, dtype=jnp.float32)             # (E, N)
    deg = dst_oh.sum(axis=0)                                       # (N,)
    A = dst_oh.T / jnp.maximum(deg, 1.0)[:, None]                  # (N, E) mean agg
    graph = (S, A)

    key = jax.random.PRNGKey(0)
    ks = jax.random.split(key, 12)
    params = {
        "wfc1": 0.1 * jax.random.normal(ks[0], (in_feats, n_kernels * n_hidden), jnp.float32),
        "wfc2": 0.1 * jax.random.normal(ks[1], (n_hidden, n_kernels * out_feats), jnp.float32),
        "wp1": 0.5 * jax.random.normal(ks[2], (2, dim), jnp.float32),
        "bp1": 0.1 * jax.random.normal(ks[3], (1, dim), jnp.float32),
        "wp2": 0.5 * jax.random.normal(ks[4], (2, dim), jnp.float32),
        "bp2": 0.1 * jax.random.normal(ks[5], (1, dim), jnp.float32),
        "mu1": 0.1 * jax.random.normal(ks[6], (n_kernels, dim), jnp.float32),
        "mu2": 0.1 * jax.random.normal(ks[7], (n_kernels, dim), jnp.float32),
        "isig1": jnp.ones((n_kernels, dim), jnp.float32),
        "isig2": jnp.ones((n_kernels, dim), jnp.float32),
        "bias1": 0.1 * jax.random.normal(ks[8], (1, n_hidden), jnp.float32),
        "bias2": 0.1 * jax.random.normal(ks[9], (1, out_feats), jnp.float32),
    }

    feat = jax.random.normal(ks[10], (N, in_feats), jnp.float32)
    pseudo = jax.random.uniform(ks[11], (E, 2), jnp.float32)

    fwd = jax.jit(functools.partial(monet_forward, dim=dim, n_kernels=n_kernels,
                                    n_hidden=n_hidden, out_feats=out_feats))
    out = jax.block_until_ready(fwd(feat, pseudo, params, graph))

    # Pure-JAX f32 reference check (kernel uses bf16 MXU operands -> loose tol).
    h_ref = _ref_layer(feat, params["wfc1"], pseudo, params["wp1"], params["bp1"],
                       params["mu1"], params["isig1"], S, A, params["bias1"],
                       n_kernels, n_hidden, False, False)
    ref = _ref_layer(h_ref, params["wfc2"], pseudo, params["wp2"], params["bp2"],
                     params["mu2"], params["isig2"], S, A, params["bias2"],
                     n_kernels, out_feats, True, True)
    assert jnp.allclose(out, ref, atol=2e-2, rtol=2e-2), (
        "mismatch vs JAX reference: max abs diff "
        f"{float(jnp.max(jnp.abs(out - ref)))}")

    print("KERNEL_OK")
</pallas_src>

<mosaic_0001>
module attributes {stable_mosaic.version = 11 : i64} {
  func.func @_fc_kernel(%arg0: i32, %arg1: memref<8x128xf32, #tpu.memory_space<vmem>>, %arg2: memref<128x384xbf16, #tpu.memory_space<vmem>>, %arg3: memref<8x384xbf16, #tpu.memory_space<vmem>>) attributes {dimension_semantics = [#tpu.dimension_semantics<parallel>], iteration_bounds = array<i64: 1>, scalar_prefetch = 0 : i64, scratch_operands = 0 : i64, tpu.core_type = #tpu.core_type<tc>, window_params = [{transform_indices = @transform_0, window_bounds = array<i64: 8, 128>}, {pipeline_mode = #tpu.pipeline_mode<synchronous>, transform_indices = @transform_1, window_bounds = array<i64: 128, 384>}, {transform_indices = @transform_2, window_bounds = array<i64: 8, 384>}]} {
    %c0 = arith.constant 0 : index
    %c0_0 = arith.constant 0 : index
    %0 = vector.load %arg1[%c0, %c0_0] : memref<8x128xf32, #tpu.memory_space<vmem>>, vector<8x128xf32>
    %1 = arith.truncf %0 : vector<8x128xf32> to vector<8x128xbf16>
    %c0_1 = arith.constant 0 : index
    %c0_2 = arith.constant 0 : index
    %2 = vector.load %arg2[%c0_1, %c0_2] : memref<128x384xbf16, #tpu.memory_space<vmem>>, vector<128x384xbf16>
    %cst = arith.constant dense<0.000000e+00> : vector<8x384xf32>
    %3 = tpu.matmul %1, %2, %cst {dimension_numbers = #tpu.dot_dimension_numbers<[1], [0], [0], [1], [0, 0, 1, 1], [], []>} : vector<8x128xbf16>, vector<128x384xbf16>, vector<8x384xf32> -> vector<8x384xf32>
    %4 = arith.truncf %3 : vector<8x384xf32> to vector<8x384xbf16>
    %c0_3 = arith.constant 0 : index
    %c0_4 = arith.constant 0 : index
    %5 = vector.load %arg3[%c0_3, %c0_4] : memref<8x384xbf16, #tpu.memory_space<vmem>>, vector<8x384xbf16>
    tpu.vector_store %arg3[%c0_3, %c0_4], %4 {strides = array<i32>} : memref<8x384xbf16, #tpu.memory_space<vmem>>, vector<8x384xbf16>,
    return
  }
  func.func @transform_0(%arg0: i32) -> (i32, i32) {
    %c0_i32 = arith.constant 0 : i32
    %c0_i32_0 = arith.constant 0 : i32
    return %arg0, %c0_i32 : i32, i32
  }
  func.func @transform_1(%arg0: i32) -> (i32, i32) {
    %c0_i32 = arith.constant 0 : i32
    %c0_i32_0 = arith.constant 0 : i32
    %c0_i32_1 = arith.constant 0 : i32
    return %c0_i32, %c0_i32_0 : i32, i32
  }
  func.func @transform_2(%arg0: i32) -> (i32, i32) {
    %c0_i32 = arith.constant 0 : i32
    %c0_i32_0 = arith.constant 0 : i32
    return %arg0, %c0_i32 : i32, i32
  }
}

module attributes {stable_mosaic.version = 11 : i64} {
  func.func @_pseudo_weight_kernel(%arg0: i32, %arg1: memref<128x2xf32, #tpu.memory_space<vmem>>, %arg2: memref<2x2xf32, #tpu.memory_space<vmem>>, %arg3: memref<1x2xf32, #tpu.memory_space<vmem>>, %arg4: memref<3x2xf32, #tpu.memory_space<vmem>>, %arg5: memref<3x2xf32, #tpu.memory_space<vmem>>, %arg6: memref<128x384xf32, #tpu.memory_space<vmem>>) attributes {dimension_semantics = [#tpu.dimension_semantics<parallel>], iteration_bounds = array<i64: 1>, scalar_prefetch = 0 : i64, scratch_operands = 0 : i64, tpu.core_type = #tpu.core_type<tc>, window_params = [{transform_indices = @transform_0, window_bounds = array<i64: 128, 2>}, {pipeline_mode = #tpu.pipeline_mode<synchronous>, transform_indices = @transform_1, window_bounds = array<i64: 2, 2>}, {pipeline_mode = #tpu.pipeline_mode<synchronous>, transform_indices = @transform_2, window_bounds = array<i64: 1, 2>}, {pipeline_mode = #tpu.pipeline_mode<synchronous>, transform_indices = @transform_3, window_bounds = array<i64: 3, 2>}, {pipeline_mode = #tpu.pipeline_mode<synchronous>, transform_indices = @transform_4, window_bounds = array<i64: 3, 2>}, {transform_indices = @transform_5, window_bounds = array<i64: 128, 384>}]} {
    %c0 = arith.constant 0 : index
    %c0_0 = arith.constant 0 : index
    %0 = vector.load %arg1[%c0, %c0_0] : memref<128x2xf32, #tpu.memory_space<vmem>>, vector<128x2xf32>
    %c0_1 = arith.constant 0 : index
    %c0_2 = arith.constant 0 : index
    %1 = vector.load %arg2[%c0_1, %c0_2] : memref<2x2xf32, #tpu.memory_space<vmem>>, vector<2x2xf32>
    %cst = arith.constant dense<0.000000e+00> : vector<128x2xf32>
    %2 = tpu.matmul %0, %1, %cst {dimension_numbers = #tpu.dot_dimension_numbers<[1], [0], [0], [1], [0, 0, 1, 1], [], []>} : vector<128x2xf32>, vector<2x2xf32>, vector<128x2xf32> -> vector<128x2xf32>
    %c0_3 = arith.constant 0 : index
    %c0_4 = arith.constant 0 : index
    %3 = vector.load %arg3[%c0_3, %c0_4] : memref<1x2xf32, #tpu.memory_space<vmem>>, vector<1x2xf32>
    %4 = vector.broadcast %3 : vector<1x2xf32> to vector<128x2xf32>
    %5 = arith.addf %2, %4 : vector<128x2xf32>
    %6 = math.tanh %5 : vector<128x2xf32>
    %c0_5 = arith.constant 0 : index
    %c0_6 = arith.constant 0 : index
    %7 = vector.load %arg4[%c0_5, %c0_6] : memref<3x2xf32, #tpu.memory_space<vmem>>, vector<1x2xf32>
    %8 = vector.shape_cast %7 : vector<1x2xf32> to vector<2xf32>
    %9 = vector.shape_cast %8 : vector<2xf32> to vector<1x2xf32>
    %10 = vector.broadcast %9 : vector<1x2xf32> to vector<128x2xf32>
    %11 = arith.subf %6, %10 : vector<128x2xf32>
    %c0_7 = arith.constant 0 : index
    %c0_8 = arith.constant 0 : index
    %12 = vector.load %arg5[%c0_7, %c0_8] : memref<3x2xf32, #tpu.memory_space<vmem>>, vector<1x2xf32>
    %13 = vector.shape_cast %12 : vector<1x2xf32> to vector<2xf32>
    %14 = vector.shape_cast %13 : vector<2xf32> to vector<1x2xf32>
    %15 = vector.broadcast %14 : vector<1x2xf32> to vector<128x2xf32>
    %16 = arith.mulf %11, %15 : vector<128x2xf32>
    %17 = arith.mulf %16, %16 : vector<128x2xf32>
    %cst_9 = arith.constant dense<0.000000e+00> : vector<128xf32>
    %18 = vector.multi_reduction <add>, %17, %cst_9 [1] : vector<128x2xf32> to vector<128xf32>
    %19 = vector.shape_cast %18 : vector<128xf32> to vector<128x1xf32>
    %cst_10 = arith.constant -5.000000e-01 : f32
    %20 = vector.broadcast %cst_10 : f32 to vector<128x1xf32>
    %21 = arith.mulf %20, %19 : vector<128x1xf32>
    %22 = math.exp %21 : vector<128x1xf32>
    %23 = vector.shape_cast %22 : vector<128x1xf32> to vector<128x1xf32>
    %24 = vector.broadcast %23 : vector<128x1xf32> to vector<128x128xf32>
    %c1 = arith.constant 1 : index
    %c0_11 = arith.constant 0 : index
    %25 = vector.load %arg4[%c1, %c0_11] : memref<3x2xf32, #tpu.memory_space<vmem>>, vector<1x2xf32>
    %26 = vector.shape_cast %25 : vector<1x2xf32> to vector<2xf32>
    %27 = vector.shape_cast %26 : vector<2xf32> to vector<1x2xf32>
    %28 = vector.broadcast %27 : vector<1x2xf32> to vector<128x2xf32>
    %29 = arith.subf %6, %28 : vector<128x2xf32>
    %c1_12 = arith.constant 1 : index
    %c0_13 = arith.constant 0 : index
    %30 = vector.load %arg5[%c1_12, %c0_13] : memref<3x2xf32, #tpu.memory_space<vmem>>, vector<1x2xf32>
    %31 = vector.shape_cast %30 : vector<1x2xf32> to vector<2xf32>
    %32 = vector.shape_cast %31 : vector<2xf32> to vector<1x2xf32>
    %33 = vector.broadcast %32 : vector<1x2xf32> to vector<128x2xf32>
    %34 = arith.mulf %29, %33 : vector<128x2xf32>
    %35 = arith.mulf %34, %34 : vector<128x2xf32>
    %cst_14 = arith.constant dense<0.000000e+00> : vector<128xf32>
    %36 = vector.multi_reduction <add>, %35, %cst_14 [1] : vector<128x2xf32> to vector<128xf32>
    %37 = vector.shape_cast %36 : vector<128xf32> to vector<128x1xf32>
    %cst_15 = arith.constant -5.000000e-01 : f32
    %38 = vector.broadcast %cst_15 : f32 to vector<128x1xf32>
    %39 = arith.mulf %38, %37 : vector<128x1xf32>
    %40 = math.exp %39 : vector<128x1xf32>
    %41 = vector.shape_cast %40 : vector<128x1xf32> to vector<128x1xf32>
    %42 = vector.broadcast %41 : vector<128x1xf32> to vector<128x128xf32>
    %c2 = arith.constant 2 : index
    %c0_16 = arith.constant 0 : index
    %43 = vector.load %arg4[%c2, %c0_16] : memref<3x2xf32, #tpu.memory_space<vmem>>, vector<1x2xf32>
    %44 = vector.shape_cast %43 : vector<1x2xf32> to vector<2xf32>
    %45 = vector.shape_cast %44 : vector<2xf32> to vector<1x2xf32>
    %46 = vector.broadcast %45 : vector<1x2xf32> to vector<128x2xf32>
    %47 = arith.subf %6, %46 : vector<128x2xf32>
    %c2_17 = arith.constant 2 : index
    %c0_18 = arith.constant 0 : index
    %48 = vector.load %arg5[%c2_17, %c0_18] : memref<3x2xf32, #tpu.memory_space<vmem>>, vector<1x2xf32>
    %49 = vector.shape_cast %48 : vector<1x2xf32> to vector<2xf32>
    %50 = vector.shape_cast %49 : vector<2xf32> to vector<1x2xf32>
    %51 = vector.broadcast %50 : vector<1x2xf32> to vector<128x2xf32>
    %52 = arith.mulf %47, %51 : vector<128x2xf32>
    %53 = arith.mulf %52, %52 : vector<128x2xf32>
    %cst_19 = arith.constant dense<0.000000e+00> : vector<128xf32>
    %54 = vector.multi_reduction <add>, %53, %cst_19 [1] : vector<128x2xf32> to vector<128xf32>
    %55 = vector.shape_cast %54 : vector<128xf32> to vector<128x1xf32>
    %cst_20 = arith.constant -5.000000e-01 : f32
    %56 = vector.broadcast %cst_20 : f32 to vector<128x1xf32>
    %57 = arith.mulf %56, %55 : vector<128x1xf32>
    %58 = math.exp %57 : vector<128x1xf32>
    %59 = vector.shape_cast %58 : vector<128x1xf32> to vector<128x1xf32>
    %60 = vector.broadcast %59 : vector<128x1xf32> to vector<128x128xf32>
    %61 = tpu.concatenate %24, %42, %60 in 1 : vector<128x128xf32>, vector<128x128xf32>, vector<128x128xf32> -> vector<128x384xf32>
    %c0_21 = arith.constant 0 : index
    %c0_22 = arith.constant 0 : index
    %62 = vector.load %arg6[%c0_21, %c0_22] : memref<128x384xf32, #tpu.memory_space<vmem>>, vector<128x384xf32>
    tpu.vector_store %arg6[%c0_21, %c0_22], %61 {strides = array<i32>} : memref<128x384xf32, #tpu.memory_space<vmem>>, vector<128x384xf32>,
    return
  }
  func.func @transform_0(%arg0: i32) -> (i32, i32) {
    %c0_i32 = arith.constant 0 : i32
    %c0_i32_0 = arith.constant 0 : i32
    return %arg0, %c0_i32 : i32, i32
  }
  func.func @transform_1(%arg0: i32) -> (i32, i32) {
    %c0_i32 = arith.constant 0 : i32
    %c0_i32_0 = arith.constant 0 : i32
    %c0_i32_1 = arith.constant 0 : i32
    return %c0_i32, %c0_i32_0 : i32, i32
  }
  func.func @transform_2(%arg0: i32) -> (i32, i32) {
    %c0_i32 = arith.constant 0 : i32
    %c0_i32_0 = arith.constant 0 : i32
    %c0_i32_1 = arith.constant 0 : i32
    return %c0_i32, %c0_i32_0 : i32, i32
  }
  func.func @transform_3(%arg0: i32) -> (i32, i32) {
    %c0_i32 = arith.constant 0 : i32
    %c0_i32_0 = arith.constant 0 : i32
    %c0_i32_1 = arith.constant 0 : i32
    return %c0_i32, %c0_i32_0 : i32, i32
  }
  func.func @transform_4(%arg0: i32) -> (i32, i32) {
    %c0_i32 = arith.constant 0 : i32
    %c0_i32_0 = arith.constant 0 : i32
    %c0_i32_1 = arith.constant 0 : i32
    return %c0_i32, %c0_i32_0 : i32, i32
  }
  func.func @transform_5(%arg0: i32) -> (i32, i32) {
    %c0_i32 = arith.constant 0 : i32
    %c0_i32_0 = arith.constant 0 : i32
    return %arg0, %c0_i32 : i32, i32
  }
}

module attributes {stable_mosaic.version = 11 : i64} {
  func.func @_aggregate_kernel(%arg0: i32, %arg1: i32, %arg2: memref<8x128xbf16, #tpu.memory_space<vmem>>, %arg3: memref<128x8xbf16, #tpu.memory_space<vmem>>, %arg4: memref<8x384xbf16, #tpu.memory_space<vmem>>, %arg5: memref<128x384xf32, #tpu.memory_space<vmem>>, %arg6: memref<1x128xf32, #tpu.memory_space<vmem>>, %arg7: memref<8x128xf32, #tpu.memory_space<vmem>>, %arg8: memref<8x384xf32, #tpu.memory_space<vmem>>) attributes {dimension_semantics = [#tpu.dimension_semantics<parallel>, #tpu.dimension_semantics<arbitrary>], iteration_bounds = array<i64: 1, 1>, scalar_prefetch = 0 : i64, scratch_operands = 1 : i64, tpu.core_type = #tpu.core_type<tc>, window_params = [{transform_indices = @transform_0, window_bounds = array<i64: 8, 128>}, {transform_indices = @transform_1, window_bounds = array<i64: 128, 8>}, {pipeline_mode = #tpu.pipeline_mode<synchronous>, transform_indices = @transform_2, window_bounds = array<i64: 8, 384>}, {transform_indices = @transform_3, window_bounds = array<i64: 128, 384>}, {pipeline_mode = #tpu.pipeline_mode<synchronous>, transform_indices = @transform_4, window_bounds = array<i64: 1, 128>}, {transform_indices = @transform_5, window_bounds = array<i64: 8, 128>}]} {
    %c0_i32 = arith.constant 0 : i32
    %0 = arith.cmpi eq, %arg1, %c0_i32 : i32
    %1 = arith.extui %0 : i1 to i32
    %c0_i32_0 = arith.constant 0 : i32
    %2 = arith.cmpi ne, %1, %c0_i32_0 : i32
    scf.if %2 {
      %cst_15 = arith.constant 0.000000e+00 : f32
      %17 = vector.broadcast %cst_15 : f32 to vector<8x384xf32>
      %c0_16 = arith.constant 0 : index
      %c0_17 = arith.constant 0 : index
      %18 = vector.load %arg8[%c0_16, %c0_17] : memref<8x384xf32, #tpu.memory_space<vmem>>, vector<8x384xf32>
      tpu.vector_store %arg8[%c0_16, %c0_17], %17 {strides = array<i32>} : memref<8x384xf32, #tpu.memory_space<vmem>>, vector<8x384xf32>,
    } else {
    }
    %c0 = arith.constant 0 : index
    %c0_1 = arith.constant 0 : index
    %3 = vector.load %arg3[%c0, %c0_1] : memref<128x8xbf16, #tpu.memory_space<vmem>>, vector<128x8xbf16>
    %c0_2 = arith.constant 0 : index
    %c0_3 = arith.constant 0 : index
    %4 = vector.load %arg4[%c0_2, %c0_3] : memref<8x384xbf16, #tpu.memory_space<vmem>>, vector<8x384xbf16>
    %cst = arith.constant dense<0.000000e+00> : vector<128x384xf32>
    %5 = tpu.matmul %3, %4, %cst {dimension_numbers = #tpu.dot_dimension_numbers<[1], [0], [0], [1], [0, 0, 1, 1], [], []>} : vector<128x8xbf16>, vector<8x384xbf16>, vector<128x384xf32> -> vector<128x384xf32>
    %c0_4 = arith.constant 0 : index
    %c0_5 = arith.constant 0 : index
    %6 = vector.load %arg5[%c0_4, %c0_5] : memref<128x384xf32, #tpu.memory_space<vmem>>, vector<128x384xf32>
    %7 = arith.mulf %5, %6 : vector<128x384xf32>
    %8 = arith.truncf %7 : vector<128x384xf32> to vector<128x384xbf16>
    %c0_6 = arith.constant 0 : index
    %c0_7 = arith.constant 0 : index
    %9 = vector.load %arg8[%c0_6, %c0_7] : memref<8x384xf32, #tpu.memory_space<vmem>>, vector<8x384xf32>
    %c0_8 = arith.constant 0 : index
    %c0_9 = arith.constant 0 : index
    %10 = vector.load %arg2[%c0_8, %c0_9] : memref<8x128xbf16, #tpu.memory_space<vmem>>, vector<8x128xbf16>
    %cst_10 = arith.constant dense<0.000000e+00> : vector<8x384xf32>
    %11 = tpu.matmul %10, %8, %cst_10 {dimension_numbers = #tpu.dot_dimension_numbers<[1], [0], [0], [1], [0, 0, 1, 1], [], []>} : vector<8x128xbf16>, vector<128x384xbf16>, vector<8x384xf32> -> vector<8x384xf32>
    %12 = arith.addf %9, %11 : vector<8x384xf32>
    %c0_11 = arith.constant 0 : index
    %c0_12 = arith.constant 0 : index
    %13 = vector.load %arg8[%c0_11, %c0_12] : memref<8x384xf32, #tpu.memory_space<vmem>>, vector<8x384xf32>
    tpu.vector_store %arg8[%c0_11, %c0_12], %12 {strides = array<i32>} : memref<8x384xf32, #tpu.memory_space<vmem>>, vector<8x384xf32>,
    %c0_i32_13 = arith.constant 0 : i32
    %14 = arith.cmpi eq, %arg1, %c0_i32_13 : i32
    %15 = arith.extui %14 : i1 to i32
    %c0_i32_14 = arith.constant 0 : i32
    %16 = arith.cmpi ne, %15, %c0_i32_14 : i32
    scf.if %16 {
      %c0_15 = arith.constant 0 : index
      %c0_16 = arith.constant 0 : index
      %17 = vector.load %arg8[%c0_15, %c0_16] : memref<8x384xf32, #tpu.memory_space<vmem>>, vector<8x384xf32>
      %18 = vector.extract_strided_slice %17 {offsets = [0, 0], sizes = [8, 128], strides = [1, 1]} : vector<8x384xf32> to vector<8x128xf32>
      %19 = vector.extract_strided_slice %17 {offsets = [0, 128], sizes = [8, 128], strides = [1, 1]} : vector<8x384xf32> to vector<8x128xf32>
      %20 = arith.addf %18, %19 : vector<8x128xf32>
      %21 = vector.extract_strided_slice %17 {offsets = [0, 256], sizes = [8, 128], strides = [1, 1]} : vector<8x384xf32> to vector<8x128xf32>
      %22 = arith.addf %20, %21 : vector<8x128xf32>
      %c0_17 = arith.constant 0 : index
      %c0_18 = arith.constant 0 : index
      %23 = vector.load %arg6[%c0_17, %c0_18] : memref<1x128xf32, #tpu.memory_space<vmem>>, vector<1x128xf32>
      %24 = vector.broadcast %23 : vector<1x128xf32> to vector<8x128xf32>
      %25 = arith.addf %22, %24 : vector<8x128xf32>
      %c0_19 = arith.constant 0 : index
      %c0_20 = arith.constant 0 : index
      %26 = vector.load %arg7[%c0_19, %c0_20] : memref<8x128xf32, #tpu.memory_space<vmem>>, vector<8x128xf32>
      tpu.vector_store %arg7[%c0_19, %c0_20], %25 {strides = array<i32>} : memref<8x128xf32, #tpu.memory_space<vmem>>, vector<8x128xf32>,
    } else {
    }
    return
  }
  func.func @transform_0(%arg0: i32, %arg1: i32) -> (i32, i32) {
    %c0_i32 = arith.constant 0 : i32
    return %arg0, %arg1 : i32, i32
  }
  func.func @transform_1(%arg0: i32, %arg1: i32) -> (i32, i32) {
    %c0_i32 = arith.constant 0 : i32
    %c0_i32_0 = arith.constant 0 : i32
    return %arg1, %c0_i32 : i32, i32
  }
  func.func @transform_2(%arg0: i32, %arg1: i32) -> (i32, i32) {
    %c0_i32 = arith.constant 0 : i32
    %c0_i32_0 = arith.constant 0 : i32
    %c0_i32_1 = arith.constant 0 : i32
    return %c0_i32, %c0_i32_0 : i32, i32
  }
  func.func @transform_3(%arg0: i32, %arg1: i32) -> (i32, i32) {
    %c0_i32 = arith.constant 0 : i32
    %c0_i32_0 = arith.constant 0 : i32
    return %arg1, %c0_i32 : i32, i32
  }
  func.func @transform_4(%arg0: i32, %arg1: i32) -> (i32, i32) {
    %c0_i32 = arith.constant 0 : i32
    %c0_i32_0 = arith.constant 0 : i32
    %c0_i32_1 = arith.constant 0 : i32
    return %c0_i32, %c0_i32_0 : i32, i32
  }
  func.func @transform_5(%arg0: i32, %arg1: i32) -> (i32, i32) {
    %c0_i32 = arith.constant 0 : i32
    %c0_i32_0 = arith.constant 0 : i32
    return %arg0, %c0_i32 : i32, i32
  }
}

module attributes {stable_mosaic.version = 11 : i64} {
  func.func @_fc_kernel(%arg0: i32, %arg1: memref<8x128xf32, #tpu.memory_space<vmem>>, %arg2: memref<128x384xbf16, #tpu.memory_space<vmem>>, %arg3: memref<8x384xbf16, #tpu.memory_space<vmem>>) attributes {dimension_semantics = [#tpu.dimension_semantics<parallel>], iteration_bounds = array<i64: 1>, scalar_prefetch = 0 : i64, scratch_operands = 0 : i64, tpu.core_type = #tpu.core_type<tc>, window_params = [{transform_indices = @transform_0, window_bounds = array<i64: 8, 128>}, {pipeline_mode = #tpu.pipeline_mode<synchronous>, transform_indices = @transform_1, window_bounds = array<i64: 128, 384>}, {transform_indices = @transform_2, window_bounds = array<i64: 8, 384>}]} {
    %c0 = arith.constant 0 : index
    %c0_0 = arith.constant 0 : index
    %0 = vector.load %arg1[%c0, %c0_0] : memref<8x128xf32, #tpu.memory_space<vmem>>, vector<8x128xf32>
    %cst = arith.constant 0.000000e+00 : f32
    %1 = vector.broadcast %cst : f32 to vector<8x128xf32>
    %2 = arith.maximumf %0, %1 : vector<8x128xf32>
    %3 = arith.truncf %2 : vector<8x128xf32> to vector<8x128xbf16>
    %c0_1 = arith.constant 0 : index
    %c0_2 = arith.constant 0 : index
    %4 = vector.load %arg2[%c0_1, %c0_2] : memref<128x384xbf16, #tpu.memory_space<vmem>>, vector<128x384xbf16>
    %cst_3 = arith.constant dense<0.000000e+00> : vector<8x384xf32>
    %5 = tpu.matmul %3, %4, %cst_3 {dimension_numbers = #tpu.dot_dimension_numbers<[1], [0], [0], [1], [0, 0, 1, 1], [], []>} : vector<8x128xbf16>, vector<128x384xbf16>, vector<8x384xf32> -> vector<8x384xf32>
    %6 = arith.truncf %5 : vector<8x384xf32> to vector<8x384xbf16>
    %c0_4 = arith.constant 0 : index
    %c0_5 = arith.constant 0 : index
    %7 = vector.load %arg3[%c0_4, %c0_5] : memref<8x384xbf16, #tpu.memory_space<vmem>>, vector<8x384xbf16>
    tpu.vector_store %arg3[%c0_4, %c0_5], %6 {strides = array<i32>} : memref<8x384xbf16, #tpu.memory_space<vmem>>, vector<8x384xbf16>,
    return
  }
  func.func @transform_0(%arg0: i32) -> (i32, i32) {
    %c0_i32 = arith.constant 0 : i32
    %c0_i32_0 = arith.constant 0 : i32
    return %arg0, %c0_i32 : i32, i32
  }
  func.func @transform_1(%arg0: i32) -> (i32, i32) {
    %c0_i32 = arith.constant 0 : i32
    %c0_i32_0 = arith.constant 0 : i32
    %c0_i32_1 = arith.constant 0 : i32
    return %c0_i32, %c0_i32_0 : i32, i32
  }
  func.func @transform_2(%arg0: i32) -> (i32, i32) {
    %c0_i32 = arith.constant 0 : i32
    %c0_i32_0 = arith.constant 0 : i32
    return %arg0, %c0_i32 : i32, i32
  }
}

module attributes {stable_mosaic.version = 11 : i64} {
  func.func @_aggregate_kernel(%arg0: i32, %arg1: i32, %arg2: memref<8x128xbf16, #tpu.memory_space<vmem>>, %arg3: memref<128x8xbf16, #tpu.memory_space<vmem>>, %arg4: memref<8x384xbf16, #tpu.memory_space<vmem>>, %arg5: memref<128x384xf32, #tpu.memory_space<vmem>>, %arg6: memref<1x128xf32, #tpu.memory_space<vmem>>, %arg7: memref<8x128xf32, #tpu.memory_space<vmem>>, %arg8: memref<8x384xf32, #tpu.memory_space<vmem>>) attributes {dimension_semantics = [#tpu.dimension_semantics<parallel>, #tpu.dimension_semantics<arbitrary>], iteration_bounds = array<i64: 1, 1>, scalar_prefetch = 0 : i64, scratch_operands = 1 : i64, tpu.core_type = #tpu.core_type<tc>, window_params = [{transform_indices = @transform_0, window_bounds = array<i64: 8, 128>}, {transform_indices = @transform_1, window_bounds = array<i64: 128, 8>}, {pipeline_mode = #tpu.pipeline_mode<synchronous>, transform_indices = @transform_2, window_bounds = array<i64: 8, 384>}, {transform_indices = @transform_3, window_bounds = array<i64: 128, 384>}, {pipeline_mode = #tpu.pipeline_mode<synchronous>, transform_indices = @transform_4, window_bounds = array<i64: 1, 128>}, {transform_indices = @transform_5, window_bounds = array<i64: 8, 128>}]} {
    %c0_i32 = arith.constant 0 : i32
    %0 = arith.cmpi eq, %arg1, %c0_i32 : i32
    %1 = arith.extui %0 : i1 to i32
    %c0_i32_0 = arith.constant 0 : i32
    %2 = arith.cmpi ne, %1, %c0_i32_0 : i32
    scf.if %2 {
      %cst_15 = arith.constant 0.000000e+00 : f32
      %17 = vector.broadcast %cst_15 : f32 to vector<8x384xf32>
      %c0_16 = arith.constant 0 : index
      %c0_17 = arith.constant 0 : index
      %18 = vector.load %arg8[%c0_16, %c0_17] : memref<8x384xf32, #tpu.memory_space<vmem>>, vector<8x384xf32>
      tpu.vector_store %arg8[%c0_16, %c0_17], %17 {strides = array<i32>} : memref<8x384xf32, #tpu.memory_space<vmem>>, vector<8x384xf32>,
    } else {
    }
    %c0 = arith.constant 0 : index
    %c0_1 = arith.constant 0 : index
    %3 = vector.load %arg3[%c0, %c0_1] : memref<128x8xbf16, #tpu.memory_space<vmem>>, vector<128x8xbf16>
    %c0_2 = arith.constant 0 : index
    %c0_3 = arith.constant 0 : index
    %4 = vector.load %arg4[%c0_2, %c0_3] : memref<8x384xbf16, #tpu.memory_space<vmem>>, vector<8x384xbf16>
    %cst = arith.constant dense<0.000000e+00> : vector<128x384xf32>
    %5 = tpu.matmul %3, %4, %cst {dimension_numbers = #tpu.dot_dimension_numbers<[1], [0], [0], [1], [0, 0, 1, 1], [], []>} : vector<128x8xbf16>, vector<8x384xbf16>, vector<128x384xf32> -> vector<128x384xf32>
    %c0_4 = arith.constant 0 : index
    %c0_5 = arith.constant 0 : index
    %6 = vector.load %arg5[%c0_4, %c0_5] : memref<128x384xf32, #tpu.memory_space<vmem>>, vector<128x384xf32>
    %7 = arith.mulf %5, %6 : vector<128x384xf32>
    %8 = arith.truncf %7 : vector<128x384xf32> to vector<128x384xbf16>
    %c0_6 = arith.constant 0 : index
    %c0_7 = arith.constant 0 : index
    %9 = vector.load %arg8[%c0_6, %c0_7] : memref<8x384xf32, #tpu.memory_space<vmem>>, vector<8x384xf32>
    %c0_8 = arith.constant 0 : index
    %c0_9 = arith.constant 0 : index
    %10 = vector.load %arg2[%c0_8, %c0_9] : memref<8x128xbf16, #tpu.memory_space<vmem>>, vector<8x128xbf16>
    %cst_10 = arith.constant dense<0.000000e+00> : vector<8x384xf32>
    %11 = tpu.matmul %10, %8, %cst_10 {dimension_numbers = #tpu.dot_dimension_numbers<[1], [0], [0], [1], [0, 0, 1, 1], [], []>} : vector<8x128xbf16>, vector<128x384xbf16>, vector<8x384xf32> -> vector<8x384xf32>
    %12 = arith.addf %9, %11 : vector<8x384xf32>
    %c0_11 = arith.constant 0 : index
    %c0_12 = arith.constant 0 : index
    %13 = vector.load %arg8[%c0_11, %c0_12] : memref<8x384xf32, #tpu.memory_space<vmem>>, vector<8x384xf32>
    tpu.vector_store %arg8[%c0_11, %c0_12], %12 {strides = array<i32>} : memref<8x384xf32, #tpu.memory_space<vmem>>, vector<8x384xf32>,
    %c0_i32_13 = arith.constant 0 : i32
    %14 = arith.cmpi eq, %arg1, %c0_i32_13 : i32
    %15 = arith.extui %14 : i1 to i32
    %c0_i32_14 = arith.constant 0 : i32
    %16 = arith.cmpi ne, %15, %c0_i32_14 : i32
    scf.if %16 {
      %c0_15 = arith.constant 0 : index
      %c0_16 = arith.constant 0 : index
      %17 = vector.load %arg8[%c0_15, %c0_16] : memref<8x384xf32, #tpu.memory_space<vmem>>, vector<8x384xf32>
      %18 = vector.extract_strided_slice %17 {offsets = [0, 0], sizes = [8, 128], strides = [1, 1]} : vector<8x384xf32> to vector<8x128xf32>
      %19 = vector.extract_strided_slice %17 {offsets = [0, 128], sizes = [8, 128], strides = [1, 1]} : vector<8x384xf32> to vector<8x128xf32>
      %20 = arith.addf %18, %19 : vector<8x128xf32>
      %21 = vector.extract_strided_slice %17 {offsets = [0, 256], sizes = [8, 128], strides = [1, 1]} : vector<8x384xf32> to vector<8x128xf32>
      %22 = arith.addf %20, %21 : vector<8x128xf32>
      %c0_17 = arith.constant 0 : index
      %c0_18 = arith.constant 0 : index
      %23 = vector.load %arg6[%c0_17, %c0_18] : memref<1x128xf32, #tpu.memory_space<vmem>>, vector<1x128xf32>
      %24 = vector.broadcast %23 : vector<1x128xf32> to vector<8x128xf32>
      %25 = arith.addf %22, %24 : vector<8x128xf32>
      %26 = tpu.iota {dimensions = array<i32: 1>} : vector<8x128xi32>
      %c4_i32 = arith.constant 4 : i32
      %27 = vector.broadcast %c4_i32 : i32 to vector<8x128xi32>
      %28 = arith.cmpi slt, %26, %27 : vector<8x128xi32>
      %cst_19 = arith.constant -1.000000e+30 : f32
      %29 = vector.broadcast %cst_19 : f32 to vector<8x128xf32>
      %30 = arith.select %28, %25, %29 : vector<8x128xi1>, vector<8x128xf32>
      %cst_20 = arith.constant dense<0xFF800000> : vector<8xf32>
      %31 = vector.multi_reduction <maximumf>, %30, %cst_20 [1] : vector<8x128xf32> to vector<8xf32>
      %32 = vector.shape_cast %31 : vector<8xf32> to vector<8x1xf32>
      %33 = vector.broadcast %32 : vector<8x1xf32> to vector<8x128xf32>
      %34 = arith.subf %30, %33 : vector<8x128xf32>
      %35 = math.exp %34 : vector<8x128xf32>
      %cst_21 = arith.constant 0.000000e+00 : f32
      %36 = vector.broadcast %cst_21 : f32 to vector<8x128xf32>
      %37 = arith.select %28, %35, %36 : vector<8x128xi1>, vector<8x128xf32>
      %cst_22 = arith.constant dense<0.000000e+00> : vector<8xf32>
      %38 = vector.multi_reduction <add>, %37, %cst_22 [1] : vector<8x128xf32> to vector<8xf32>
      %39 = vector.shape_cast %38 : vector<8xf32> to vector<8x1xf32>
      %40 = math.log %39 : vector<8x1xf32>
      %41 = vector.broadcast %40 : vector<8x1xf32> to vector<8x128xf32>
      %42 = arith.subf %34, %41 : vector<8x128xf32>
      %cst_23 = arith.constant 0.000000e+00 : f32
      %43 = vector.broadcast %cst_23 : f32 to vector<8x128xf32>
      %44 = arith.select %28, %42, %43 : vector<8x128xi1>, vector<8x128xf32>
      %c0_24 = arith.constant 0 : index
      %c0_25 = arith.constant 0 : index
      %45 = vector.load %arg7[%c0_24, %c0_25] : memref<8x128xf32, #tpu.memory_space<vmem>>, vector<8x128xf32>
      tpu.vector_store %arg7[%c0_24, %c0_25], %44 {strides = array<i32>} : memref<8x128xf32, #tpu.memory_space<vmem>>, vector<8x128xf32>,
    } else {
    }
    return
  }
  func.func @transform_0(%arg0: i32, %arg1: i32) -> (i32, i32) {
    %c0_i32 = arith.constant 0 : i32
    return %arg0, %arg1 : i32, i32
  }
  func.func @transform_1(%arg0: i32, %arg1: i32) -> (i32, i32) {
    %c0_i32 = arith.constant 0 : i32
    %c0_i32_0 = arith.constant 0 : i32
    return %arg1, %c0_i32 : i32, i32
  }
  func.func @transform_2(%arg0: i32, %arg1: i32) -> (i32, i32) {
    %c0_i32 = arith.constant 0 : i32
    %c0_i32_0 = arith.constant 0 : i32
    %c0_i32_1 = arith.constant 0 : i32
    return %c0_i32, %c0_i32_0 : i32, i32
  }
  func.func @transform_3(%arg0: i32, %arg1: i32) -> (i32, i32) {
    %c0_i32 = arith.constant 0 : i32
    %c0_i32_0 = arith.constant 0 : i32
    return %arg1, %c0_i32 : i32, i32
  }
  func.func @transform_4(%arg0: i32, %arg1: i32) -> (i32, i32) {
    %c0_i32 = arith.constant 0 : i32
    %c0_i32_0 = arith.constant 0 : i32
    %c0_i32_1 = arith.constant 0 : i32
    return %c0_i32, %c0_i32_0 : i32, i32
  }
  func.func @transform_5(%arg0: i32, %arg1: i32) -> (i32, i32) {
    %c0_i32 = arith.constant 0 : i32
    %c0_i32_0 = arith.constant 0 : i32
    return %arg0, %c0_i32 : i32, i32
  }
}

</mosaic_0001>

<llo_original>
// kernel: monet_forward.8
$region0: #{monet_forward.8}
  #allocation0 [shape = 'u32[]', space=smem, size = 0x4, offset = 0x4, fixed_abs, tag = 'smem constant byte address 0x4 - core index']
  #allocation1 [shape = 'u32[144,128]{1,0:T(1,128)}', space=vmem, size = 0x12000, scoped, tag = 'internal scratch']
  %s0 = inlined_call_operand.vmem [shape: f32[8,128], index: 0, kind: input, shape index: {}]
  %s1 = inlined_call_operand.vmem [shape: bf16[128,384], index: 1, kind: input, shape index: {}]
  %s2 = inlined_call_operand.vmem [shape: bf16[8,384], index: 2, kind: output, shape index: {}]
  %s3 = sld [smem:[#allocation0]]
  $region18: #{monet_forward.8} parent=0
    _
  %s5 = ssub.s32 1, %s3
  %s6 = scalar_select 0, %s5, %s3
  // Predicated region
  $region2: #{monet_forward.8} parent=0 // pred_check
    _
  $region3: #{monet_forward.8} parent=0 // pred_check_branch
    %8 = sbr.rel (0) target = $region5
  $region4: #{monet_forward.8} parent=0 // pred_region
    _
  $region5: #{monet_forward.8} parent=0 // pred_fallthru
    _
  // Predicated region
  $region6: #{monet_forward.8} parent=0 // pred_check
    _
  $region7: #{monet_forward.8} parent=0 // pred_check_branch
    %10 = sbr.rel (0) target = $region9
  $region8: #{monet_forward.8} parent=0 // pred_region
    _
  $region9: #{monet_forward.8} parent=0 // pred_fallthru
    _
  %v12 = vld [vmem:[%s0] sm:$0xff]
  %v13 = vpack.c.bf16 %v12, %v12
  %v14 = vld [vmem:[%s1] sm:$0xff]
  %v15 = vld [vmem:[%s1 + $0x8] sm:$0xf]
  %v16 = vld [vmem:[%s1 + $0xc] sm:$0xff]
  %v17 = vld [vmem:[%s1 + $0x14] sm:$0xf]
  %v18 = vld [vmem:[%s1 + $0x18] sm:$0xff]
  %v19 = vld [vmem:[%s1 + $0x20] sm:$0xf]
  %v20 = vld [vmem:[%s1 + $0x24] sm:$0xff]
  %v21 = vld [vmem:[%s1 + $0x2c] sm:$0xf]
  %v22 = vld [vmem:[%s1 + $0x30] sm:$0xff]
  %v23 = vld [vmem:[%s1 + $0x38] sm:$0xf]
  %v24 = vld [vmem:[%s1 + $0x3c] sm:$0xff]
  %v25 = vld [vmem:[%s1 + $0x44] sm:$0xf]
  %v26 = vld [vmem:[%s1 + $0x48] sm:$0xff]
  %v27 = vld [vmem:[%s1 + $0x50] sm:$0xf]
  %v28 = vld [vmem:[%s1 + $0x54] sm:$0xff]
  %v29 = vld [vmem:[%s1 + $0x5c] sm:$0xf]
  %v30 = vld [vmem:[%s1 + $0x60] sm:$0xff]
  %v31 = vld [vmem:[%s1 + $0x68] sm:$0xf]
  %v32 = vld [vmem:[%s1 + $0x6c] sm:$0xff]
  %v33 = vld [vmem:[%s1 + $0x74] sm:$0xf]
  %v34 = vld [vmem:[%s1 + $0x78] sm:$0xff]
  %v35 = vld [vmem:[%s1 + $0x80] sm:$0xf]
  %v36 = vld [vmem:[%s1 + $0x84] sm:$0xff]
  %v37 = vld [vmem:[%s1 + $0x8c] sm:$0xf]
  %v38 = vld [vmem:[%s1 + $0x90] sm:$0xff]
  %v39 = vld [vmem:[%s1 + $0x98] sm:$0xf]
  %v40 = vld [vmem:[%s1 + $0x9c] sm:$0xff]
  %v41 = vld [vmem:[%s1 + $0xa4] sm:$0xf]
  %v42 = vld [vmem:[%s1 + $0xa8] sm:$0xff]
  %v43 = vld [vmem:[%s1 + $0xb0] sm:$0xf]
  %v44 = vld [vmem:[%s1 + $0xb4] sm:$0xff]
  %v45 = vld [vmem:[%s1 + $0xbc] sm:$0xf]
  %v78 = vunpack.c.l.b16 %v14
  %v79 = vunpack.c.h.b16 %v14
  %v80 = vunpack.c.l.b16 %v15
  %v81 = vunpack.c.l.b16 %v16
  %v82 = vunpack.c.h.b16 %v16
  %v83 = vunpack.c.l.b16 %v17
  %v84 = vunpack.c.l.b16 %v18
  %v85 = vunpack.c.h.b16 %v18
  %v86 = vunpack.c.l.b16 %v19
  %v87 = vunpack.c.l.b16 %v20
  %v88 = vunpack.c.h.b16 %v20
  %v89 = vunpack.c.l.b16 %v21
  %v90 = vunpack.c.l.b16 %v22
  %v91 = vunpack.c.h.b16 %v22
  %v92 = vunpack.c.l.b16 %v23
  %v93 = vunpack.c.l.b16 %v24
  %v94 = vunpack.c.h.b16 %v24
  %v95 = vunpack.c.l.b16 %v25
  %v96 = vunpack.c.l.b16 %v26
  %v97 = vunpack.c.h.b16 %v26
  %v98 = vunpack.c.l.b16 %v27
  %v99 = vunpack.c.l.b16 %v28
  %v100 = vunpack.c.h.b16 %v28
  %v101 = vunpack.c.l.b16 %v29
  %v102 = vunpack.c.l.b16 %v30
  %v103 = vunpack.c.h.b16 %v30
  %v104 = vunpack.c.l.b16 %v31
  %v105 = vunpack.c.l.b16 %v32
  %v106 = vunpack.c.h.b16 %v32
  %v107 = vunpack.c.l.b16 %v33
  %v108 = vunpack.c.l.b16 %v34
  %v109 = vunpack.c.h.b16 %v34
  %v110 = vunpack.c.l.b16 %v35
  %v111 = vunpack.c.l.b16 %v36
  %v112 = vunpack.c.h.b16 %v36
  %v113 = vunpack.c.l.b16 %v37
  %v114 = vunpack.c.l.b16 %v38
  %v115 = vunpack.c.h.b16 %v38
  %v116 = vunpack.c.l.b16 %v39
  %v117 = vunpack.c.l.b16 %v40
  %v118 = vunpack.c.h.b16 %v40
  %v119 = vunpack.c.l.b16 %v41
  %v120 = vunpack.c.l.b16 %v42
  %v121 = vunpack.c.h.b16 %v42
  %v122 = vunpack.c.l.b16 %v43
  %v123 = vunpack.c.l.b16 %v44
  %v124 = vunpack.c.h.b16 %v44
  %v125 = vunpack.c.l.b16 %v45
  %v126 = vpack.c.b16 %v81, %v78
  %v127 = vpack.c.b16 %v82, %v79
  %v128 = vpack.c.b16 %v83, %v80
  %v129 = vpack.c.b16 %v87, %v84
  %v130 = vpack.c.b16 %v88, %v85
  %v131 = vpack.c.b16 %v89, %v86
  %v132 = vpack.c.b16 %v93, %v90
  %v133 = vpack.c.b16 %v94, %v91
  %v134 = vpack.c.b16 %v95, %v92
  %v135 = vpack.c.b16 %v99, %v96
  %v136 = vpack.c.b16 %v100, %v97
  %v137 = vpack.c.b16 %v101, %v98
  %v138 = vpack.c.b16 %v105, %v102
  %v139 = vpack.c.b16 %v106, %v103
  %v140 = vpack.c.b16 %v107, %v104
  %v141 = vpack.c.b16 %v111, %v108
  %v142 = vpack.c.b16 %v112, %v109
  %v143 = vpack.c.b16 %v113, %v110
  %v144 = vpack.c.b16 %v117, %v114
  %v145 = vpack.c.b16 %v118, %v115
  %v146 = vpack.c.b16 %v119, %v116
  %v147 = vpack.c.b16 %v123, %v120
  %v148 = vpack.c.b16 %v124, %v121
  %v149 = vpack.c.b16 %v125, %v122
  %174 = vmatprep.subr.bf16.mxu0 %v127
  %175 = vmatpush1.bf16.msra.mxu0 %v126
  %176 = vmatprep.subr.bf16.mxu0 %v130
  %177 = vmatpush1.bf16.msra.mxu0 %v129
  %178 = vmatprep.subr.bf16.mxu0 %v133
  %179 = vmatpush1.bf16.msra.mxu0 %v132
  %180 = vmatprep.subr.bf16.mxu0 %v136
  %181 = vmatpush1.bf16.msra.mxu0 %v135
  %182 = vmatprep.subr.bf16.mxu0 %v139
  %183 = vmatpush1.bf16.msra.mxu0 %v138
  %184 = vmatprep.subr.bf16.mxu0 %v142
  %185 = vmatpush1.bf16.msra.mxu0 %v141
  %186 = vmatprep.subr.bf16.mxu0 %v145
  %187 = vmatpush1.bf16.msra.mxu0 %v144
  %188 = vmatprep.subr.bf16.mxu0 %v148
  %189 = vmatpush1.bf16.msra.mxu0 %v147
  %190 = vmatprep.subr.bf16.mxu0 0
  %191 = vmatpush1.bf16.msra.mxu0 0
  %192 = vmatprep.subr.bf16.mxu0 0
  %193 = vmatpush1.bf16.msra.mxu0 0
  %194 = vmatprep.subr.bf16.mxu0 0
  %195 = vmatpush1.bf16.msra.mxu0 0
  %196 = vmatprep.subr.bf16.mxu0 0
  %197 = vmatpush1.bf16.msra.mxu0 0
  %198 = vmatprep.subr.bf16.mxu0 0
  %199 = vmatpush1.bf16.msra.mxu0 0
  %200 = vmatprep.subr.bf16.mxu0 0
  %201 = vmatpush1.bf16.msra.mxu0 0
  %202 = vmatprep.subr.bf16.mxu0 0
  %203 = vmatpush1.bf16.msra.mxu0 0
  %204 = vmatprep.subr.bf16.mxu0 0
  %205 = vmatpush1.bf16.msra.mxu0 0
  %206 = vmatprep.mubr.bf16.mxu0 0
  %207 = vmatmul.mubr.bf16.gmra.mrb[0].mxu0 %v13
  %v208 = vpop.f32.mrb[0].mxu0
  %v209 = vadd.f32 0.0, %v208
  %v210 = vpop.f32.mrb[0].mxu0
  %v211 = vadd.f32 0.0, %v210
  %v212 = vpop.f32.mrb[0].mxu0
  %v213 = vpop.f32.mrb[0].mxu0
  %214 = vdwg.mxu0
  %215 = vmatprep.subr.bf16.mxu0 0
  %216 = vmatpush1.bf16.msra.mxu0 %v128
  %217 = vmatprep.subr.bf16.mxu0 0
  %218 = vmatpush1.bf16.msra.mxu0 %v131
  %219 = vmatprep.subr.bf16.mxu0 0
  %220 = vmatpush1.bf16.msra.mxu0 %v134
  %221 = vmatprep.subr.bf16.mxu0 0
  %222 = vmatpush1.bf16.msra.mxu0 %v137
  %223 = vmatprep.subr.bf16.mxu0 0
  %224 = vmatpush1.bf16.msra.mxu0 %v140
  %225 = vmatprep.subr.bf16.mxu0 0
  %226 = vmatpush1.bf16.msra.mxu0 %v143
  %227 = vmatprep.subr.bf16.mxu0 0
  %228 = vmatpush1.bf16.msra.mxu0 %v146
  %229 = vmatprep.subr.bf16.mxu0 0
  %230 = vmatpush1.bf16.msra.mxu0 %v149
  %231 = vmatprep.subr.bf16.mxu0 0
  %232 = vmatpush1.bf16.msra.mxu0 0
  %233 = vmatprep.subr.bf16.mxu0 0
  %234 = vmatpush1.bf16.msra.mxu0 0
  %235 = vmatprep.subr.bf16.mxu0 0
  %236 = vmatpush1.bf16.msra.mxu0 0
  %237 = vmatprep.subr.bf16.mxu0 0
  %238 = vmatpush1.bf16.msra.mxu0 0
  %239 = vmatprep.subr.bf16.mxu0 0
  %240 = vmatpush1.bf16.msra.mxu0 0
  %241 = vmatprep.subr.bf16.mxu0 0
  %242 = vmatpush1.bf16.msra.mxu0 0
  %243 = vmatprep.subr.bf16.mxu0 0
  %244 = vmatpush1.bf16.msra.mxu0 0
  %245 = vmatprep.subr.bf16.mxu0 0
  %246 = vmatpush1.bf16.msra.mxu0 0
  %247 = vmatprep.mubr.bf16.mxu0 0
  %248 = vmatmul.mubr.bf16.gmra.mrb[0].mxu0 %v13
  %v249 = vpop.f32.mrb[0].mxu0
  %v250 = vadd.f32 0.0, %v249
  %v251 = vpop.f32.mrb[0].mxu0
  %v252 = vpop.f32.mrb[0].mxu0
  %v253 = vpop.f32.mrb[0].mxu0
  %254 = vdwg.mxu0
  %v255 = vpack.c.bf16 %v209, %v209
  %v256 = vpack.c.bf16 %v211, %v211
  %v257 = vpack.c.bf16 %v250, %v250
  %v261 = vunpack.c.l.b16 %v255
  %v262 = vunpack.c.l.b16 %v256
  %v263 = vunpack.c.l.b16 %v257
  %v264 = vpack.c.b16 %v262, %v261
  %v265 = vpack.c.b16 %v263, %v263
  %268 = vst [vmem:[%s2] sm:$0xff] %v264
  %269 = vst [vmem:[%s2 + $0x8] sm:$0xf] %v265
  // Predicated region
  $region10: #{monet_forward.8} parent=0 // pred_check
    _
  $region11: #{monet_forward.8} parent=0 // pred_check_branch
    %271 = sbr.rel (0) target = $region13
  $region12: #{monet_forward.8} parent=0 // pred_region
    _
  $region13: #{monet_forward.8} parent=0 // pred_fallthru
    _
  // Predicated region
  $region14: #{monet_forward.8} parent=0 // pred_check
    _
  $region15: #{monet_forward.8} parent=0 // pred_check_branch
    %273 = sbr.rel (0) target = $region17
  $region16: #{monet_forward.8} parent=0 // pred_region
    _
  $region17: #{monet_forward.8} parent=0 // pred_fallthru
    _

// kernel: monet_forward.6
$region0: #{monet_forward.6}
  #allocation0 [shape = 'u32[]', space=smem, size = 0x4, offset = 0x4, fixed_abs, tag = 'smem constant byte address 0x4 - core index']
  #allocation1 [shape = 'u32[144,128]{1,0:T(1,128)}', space=vmem, size = 0x12000, scoped, tag = 'internal scratch']
  %s0 = inlined_call_operand.vmem [shape: f32[128,2], index: 0, kind: input, shape index: {}]
  %s1 = inlined_call_operand.vmem [shape: f32[2,2], index: 1, kind: input, shape index: {}]
  %s2 = inlined_call_operand.vmem [shape: f32[1,2], index: 2, kind: input, shape index: {}]
  %s3 = inlined_call_operand.vmem [shape: f32[3,2], index: 3, kind: input, shape index: {}]
  %s4 = inlined_call_operand.vmem [shape: f32[3,2], index: 4, kind: input, shape index: {}]
  %s5 = inlined_call_operand.vmem [shape: f32[128,384], index: 5, kind: output, shape index: {}]
  %s6 = sld [smem:[#allocation0]]
  $region30: #{monet_forward.6} parent=0
    _
  %s8 = ssub.s32 1, %s6
  %s9 = scalar_select 0, %s8, %s6
  // Predicated region
  $region2: #{monet_forward.6} parent=0 // pred_check
    _
  $region3: #{monet_forward.6} parent=0 // pred_check_branch
    %11 = sbr.rel (0) target = $region5
  $region4: #{monet_forward.6} parent=0 // pred_region
    _
  $region5: #{monet_forward.6} parent=0 // pred_fallthru
    _
  // Predicated region
  $region6: #{monet_forward.6} parent=0 // pred_check
    _
  $region7: #{monet_forward.6} parent=0 // pred_check_branch
    %13 = sbr.rel (0) target = $region9
  $region8: #{monet_forward.6} parent=0 // pred_region
    _
  $region9: #{monet_forward.6} parent=0 // pred_fallthru
    _
  // Predicated region
  $region10: #{monet_forward.6} parent=0 // pred_check
    _
  $region11: #{monet_forward.6} parent=0 // pred_check_branch
    %15 = sbr.rel (0) target = $region13
  $region12: #{monet_forward.6} parent=0 // pred_region
    _
  $region13: #{monet_forward.6} parent=0 // pred_fallthru
    _
  // Predicated region
  $region14: #{monet_forward.6} parent=0 // pred_check
    _
  $region15: #{monet_forward.6} parent=0 // pred_check_branch
    %17 = sbr.rel (0) target = $region17
  $region16: #{monet_forward.6} parent=0 // pred_region
    _
  $region17: #{monet_forward.6} parent=0 // pred_fallthru
    _
  // Predicated region
  $region18: #{monet_forward.6} parent=0 // pred_check
    _
  $region19: #{monet_forward.6} parent=0 // pred_check_branch
    %19 = sbr.rel (0) target = $region21
  $region20: #{monet_forward.6} parent=0 // pred_region
    _
  $region21: #{monet_forward.6} parent=0 // pred_fallthru
    _
  %v20 = vld [vmem:[%s0] sm:$0xff]
  %v21 = vld [vmem:[%s0 + $0x8] sm:$0xff]
  %v22 = vld [vmem:[%s0 + $0x10] sm:$0xff]
  %v23 = vld [vmem:[%s0 + $0x18] sm:$0xff]
  %v24 = vld [vmem:[%s0 + $0x20] sm:$0xff]
  %v25 = vld [vmem:[%s0 + $0x28] sm:$0xff]
  %v26 = vld [vmem:[%s0 + $0x30] sm:$0xff]
  %v27 = vld [vmem:[%s0 + $0x38] sm:$0xff]
  %v28 = vld [vmem:[%s0 + $0x40] sm:$0xff]
  %v29 = vld [vmem:[%s0 + $0x48] sm:$0xff]
  %v30 = vld [vmem:[%s0 + $0x50] sm:$0xff]
  %v31 = vld [vmem:[%s0 + $0x58] sm:$0xff]
  %v32 = vld [vmem:[%s0 + $0x60] sm:$0xff]
  %v33 = vld [vmem:[%s0 + $0x68] sm:$0xff]
  %v34 = vld [vmem:[%s0 + $0x70] sm:$0xff]
  %v35 = vld [vmem:[%s0 + $0x78] sm:$0xff]
  %v36 = vld [vmem:[%s1] sm:$0x3]
  %v37 = vld [vmem:[%s2] sm:$0x1]
  %v39 = vlaneseq
  %v40 = vshrl.u32 %v39, 7
  %v41 = vsub.s32 0, %v40
  %v42 = vrot.slane %v37, %v41
  %vm44 = vcmask 15360
  %v46 = vsel %vm44, %v20, 0
  %v49 = vsel %vm44, %v21, 0
  %v52 = vsel %vm44, %v22, 0
  %v55 = vsel %vm44, %v23, 0
  %v58 = vsel %vm44, %v24, 0
  %v61 = vsel %vm44, %v25, 0
  %v64 = vsel %vm44, %v26, 0
  %v67 = vsel %vm44, %v27, 0
  %v70 = vsel %vm44, %v28, 0
  %v73 = vsel %vm44, %v29, 0
  %v76 = vsel %vm44, %v30, 0
  %v79 = vsel %vm44, %v31, 0
  %v82 = vsel %vm44, %v32, 0
  %v85 = vsel %vm44, %v33, 0
  %v88 = vsel %vm44, %v34, 0
  %v91 = vsel %vm44, %v35, 0
  %vm93 = vcmask 1041408
  %v95 = vsel %vm93, %v36, 0
  %97 = vmatprep.subr.mxu0 0.0
  %98 = vmatpush1.msra.mxu0 %v95
  %99 = vmatprep.subr.mxu0 0.0
  %100 = vmatpush1.msra.mxu0 0.0
  %101 = vmatprep.subr.mxu0 0.0
  %102 = vmatpush1.msra.mxu0 0.0
  %103 = vmatprep.subr.mxu0 0.0
  %104 = vmatpush1.msra.mxu0 0.0
  %105 = vmatprep.subr.mxu0 0.0
  %106 = vmatpush1.msra.mxu0 0.0
  %107 = vmatprep.subr.mxu0 0.0
  %108 = vmatpush1.msra.mxu0 0.0
  %109 = vmatprep.subr.mxu0 0.0
  %110 = vmatpush1.msra.mxu0 0.0
  %111 = vmatprep.subr.mxu0 0.0
  %112 = vmatpush1.msra.mxu0 0.0
  %113 = vmatprep.subr.mxu0 0.0
  %114 = vmatpush1.msra.mxu0 0.0
  %115 = vmatprep.subr.mxu0 0.0
  %116 = vmatpush1.msra.mxu0 0.0
  %117 = vmatprep.subr.mxu0 0.0
  %118 = vmatpush1.msra.mxu0 0.0
  %119 = vmatprep.subr.mxu0 0.0
  %120 = vmatpush1.msra.mxu0 0.0
  %121 = vmatprep.subr.mxu0 0.0
  %122 = vmatpush1.msra.mxu0 0.0
  %123 = vmatprep.subr.mxu0 0.0
  %124 = vmatpush1.msra.mxu0 0.0
  %125 = vmatprep.subr.mxu0 0.0
  %126 = vmatpush1.msra.mxu0 0.0
  %127 = vmatprep.subr.mxu0 0.0
  %128 = vmatpush1.msra.mxu0 0.0
  %129 = vmatprep.subr.mxu0 0.0
  %130 = vmatpush1.msra.mxu0 0.0
  %131 = vmatprep.subr.mxu0 0.0
  %132 = vmatpush1.msra.mxu0 0.0
  %133 = vmatprep.subr.mxu0 0.0
  %134 = vmatpush1.msra.mxu0 0.0
  %135 = vmatprep.subr.mxu0 0.0
  %136 = vmatpush1.msra.mxu0 0.0
  %137 = vmatprep.subr.mxu0 0.0
  %138 = vmatpush1.msra.mxu0 0.0
  %139 = vmatprep.subr.mxu0 0.0
  %140 = vmatpush1.msra.mxu0 0.0
  %141 = vmatprep.subr.mxu0 0.0
  %142 = vmatpush1.msra.mxu0 0.0
  %143 = vmatprep.subr.mxu0 0.0
  %144 = vmatpush1.msra.mxu0 0.0
  %145 = vmatprep.subr.mxu0 0.0
  %146 = vmatpush1.msra.mxu0 0.0
  %147 = vmatprep.subr.mxu0 0.0
  %148 = vmatpush1.msra.mxu0 0.0
  %149 = vmatprep.subr.mxu0 0.0
  %150 = vmatpush1.msra.mxu0 0.0
  %151 = vmatprep.subr.mxu0 0.0
  %152 = vmatpush1.msra.mxu0 0.0
  %153 = vmatprep.subr.mxu0 0.0
  %154 = vmatpush1.msra.mxu0 0.0
  %155 = vmatprep.subr.mxu0 0.0
  %156 = vmatpush1.msra.mxu0 0.0
  %157 = vmatprep.subr.mxu0 0.0
  %158 = vmatpush1.msra.mxu0 0.0
  %159 = vmatprep.subr.mxu0 0.0
  %160 = vmatpush1.msra.mxu0 0.0
  %161 = vmatprep.mubr.f32.mxu0 0.0
  %162 = vmatmul.mubr.f32.gmra.mrb[0].mxu0 %v46
  %v163 = vpop.f32.mrb[0].mxu0
  %v164 = vadd.f32 %v42, %v163
  %v165 = vpop.f32.mrb[0].mxu0
  %166 = vmatprep.mubr.f32.mxu0 0.0
  %167 = vmatmul.mubr.f32.gmra.mrb[0].mxu0 %v49
  %v168 = vpop.f32.mrb[0].mxu0
  %v169 = vadd.f32 %v42, %v168
  %v170 = vpop.f32.mrb[0].mxu0
  %171 = vmatprep.mubr.f32.mxu0 0.0
  %172 = vmatmul.mubr.f32.gmra.mrb[0].mxu0 %v52
  %v173 = vpop.f32.mrb[0].mxu0
  %v174 = vadd.f32 %v42, %v173
  %v175 = vpop.f32.mrb[0].mxu0
  %176 = vmatprep.mubr.f32.mxu0 0.0
  %177 = vmatmul.mubr.f32.gmra.mrb[0].mxu0 %v55
  %v178 = vpop.f32.mrb[0].mxu0
  %v179 = vadd.f32 %v42, %v178
  %v180 = vpop.f32.mrb[0].mxu0
  %181 = vmatprep.mubr.f32.mxu0 0.0
  %182 = vmatmul.mubr.f32.gmra.mrb[0].mxu0 %v58
  %v183 = vpop.f32.mrb[0].mxu0
  %v184 = vadd.f32 %v42, %v183
  %v185 = vpop.f32.mrb[0].mxu0
  %186 = vmatprep.mubr.f32.mxu0 0.0
  %187 = vmatmul.mubr.f32.gmra.mrb[0].mxu0 %v61
  %v188 = vpop.f32.mrb[0].mxu0
  %v189 = vadd.f32 %v42, %v188
  %v190 = vpop.f32.mrb[0].mxu0
  %191 = vmatprep.mubr.f32.mxu0 0.0
  %192 = vmatmul.mubr.f32.gmra.mrb[0].mxu0 %v64
  %v193 = vpop.f32.mrb[0].mxu0
  %v194 = vadd.f32 %v42, %v193
  %v195 = vpop.f32.mrb[0].mxu0
  %196 = vmatprep.mubr.f32.mxu0 0.0
  %197 = vmatmul.mubr.f32.gmra.mrb[0].mxu0 %v67
  %v198 = vpop.f32.mrb[0].mxu0
  %v199 = vadd.f32 %v42, %v198
  %v200 = vpop.f32.mrb[0].mxu0
  %201 = vmatprep.mubr.f32.mxu0 0.0
  %202 = vmatmul.mubr.f32.gmra.mrb[0].mxu0 %v70
  %v203 = vpop.f32.mrb[0].mxu0
  %v204 = vadd.f32 %v42, %v203
  %v205 = vpop.f32.mrb[0].mxu0
  %206 = vmatprep.mubr.f32.mxu0 0.0
  %207 = vmatmul.mubr.f32.gmra.mrb[0].mxu0 %v73
  %v208 = vpop.f32.mrb[0].mxu0
  %v209 = vadd.f32 %v42, %v208
  %v210 = vpop.f32.mrb[0].mxu0
  %211 = vmatprep.mubr.f32.mxu0 0.0
  %212 = vmatmul.mubr.f32.gmra.mrb[0].mxu0 %v76
  %v213 = vpop.f32.mrb[0].mxu0
  %v214 = vadd.f32 %v42, %v213
  %v215 = vpop.f32.mrb[0].mxu0
  %216 = vmatprep.mubr.f32.mxu0 0.0
  %217 = vmatmul.mubr.f32.gmra.mrb[0].mxu0 %v79
  %v218 = vpop.f32.mrb[0].mxu0
  %v219 = vadd.f32 %v42, %v218
  %v220 = vpop.f32.mrb[0].mxu0
  %221 = vmatprep.mubr.f32.mxu0 0.0
  %222 = vmatmul.mubr.f32.gmra.mrb[0].mxu0 %v82
  %v223 = vpop.f32.mrb[0].mxu0
  %v224 = vadd.f32 %v42, %v223
  %v225 = vpop.f32.mrb[0].mxu0
  %226 = vmatprep.mubr.f32.mxu0 0.0
  %227 = vmatmul.mubr.f32.gmra.mrb[0].mxu0 %v85
  %v228 = vpop.f32.mrb[0].mxu0
  %v229 = vadd.f32 %v42, %v228
  %v230 = vpop.f32.mrb[0].mxu0
  %231 = vmatprep.mubr.f32.mxu0 0.0
  %232 = vmatmul.mubr.f32.gmra.mrb[0].mxu0 %v88
  %v233 = vpop.f32.mrb[0].mxu0
  %v234 = vadd.f32 %v42, %v233
  %v235 = vpop.f32.mrb[0].mxu0
  %236 = vmatprep.mubr.f32.mxu0 0.0
  %237 = vmatmul.mubr.f32.gmra.mrb[0].mxu0 %v91
  %v238 = vpop.f32.mrb[0].mxu0
  %v239 = vadd.f32 %v42, %v238
  %v240 = vpop.f32.mrb[0].mxu0
  %241 = vdwg.mxu0
  %v242 = vtanh.pop %v164
  %v243 = vtanh.pop %v169
  %v244 = vtanh.pop %v174
  %v245 = vtanh.pop %v179
  %v246 = vtanh.pop %v184
  %v247 = vtanh.pop %v189
  %v248 = vtanh.pop %v194
  %v249 = vtanh.pop %v199
  %v250 = vtanh.pop %v204
  %v251 = vtanh.pop %v209
  %v252 = vtanh.pop %v214
  %v253 = vtanh.pop %v219
  %v254 = vtanh.pop %v224
  %v255 = vtanh.pop %v229
  %v256 = vtanh.pop %v234
  %v257 = vtanh.pop %v239
  %v258 = vld [vmem:[%s3] sm:$0x1]
  %v259 = vlaneseq
  %v260 = vshrl.u32 %v259, 7
  %v261 = vsub.s32 0, %v260
  %v262 = vrot.slane %v258, %v261
  %v263 = vsub.f32 %v242, %v262
  %v264 = vsub.f32 %v243, %v262
  %v265 = vsub.f32 %v244, %v262
  %v266 = vsub.f32 %v245, %v262
  %v267 = vsub.f32 %v246, %v262
  %v268 = vsub.f32 %v247, %v262
  %v269 = vsub.f32 %v248, %v262
  %v270 = vsub.f32 %v249, %v262
  %v271 = vsub.f32 %v250, %v262
  %v272 = vsub.f32 %v251, %v262
  %v273 = vsub.f32 %v252, %v262
  %v274 = vsub.f32 %v253, %v262
  %v275 = vsub.f32 %v254, %v262
  %v276 = vsub.f32 %v255, %v262
  %v277 = vsub.f32 %v256, %v262
  %v278 = vsub.f32 %v257, %v262
  %v279 = vld [vmem:[%s4] sm:$0x1]
  %v280 = vlaneseq
  %v281 = vshrl.u32 %v280, 7
  %v282 = vsub.s32 0, %v281
  %v283 = vrot.slane %v279, %v282
  %v284 = vmul.f32 %v263, %v283
  %v285 = vmul.f32 %v264, %v283
  %v286 = vmul.f32 %v265, %v283
  %v287 = vmul.f32 %v266, %v283
  %v288 = vmul.f32 %v267, %v283
  %v289 = vmul.f32 %v268, %v283
  %v290 = vmul.f32 %v269, %v283
  %v291 = vmul.f32 %v270, %v283
  %v292 = vmul.f32 %v271, %v283
  %v293 = vmul.f32 %v272, %v283
  %v294 = vmul.f32 %v273, %v283
  %v295 = vmul.f32 %v274, %v283
  %v296 = vmul.f32 %v275, %v283
  %v297 = vmul.f32 %v276, %v283
  %v298 = vmul.f32 %v277, %v283
  %v299 = vmul.f32 %v278, %v283
  %v300 = vmul.f32 %v284, %v284
  %v301 = vmul.f32 %v285, %v285
  %v302 = vmul.f32 %v286, %v286
  %v303 = vmul.f32 %v287, %v287
  %v304 = vmul.f32 %v288, %v288
  %v305 = vmul.f32 %v289, %v289
  %v306 = vmul.f32 %v290, %v290
  %v307 = vmul.f32 %v291, %v291
  %v308 = vmul.f32 %v292, %v292
  %v309 = vmul.f32 %v293, %v293
  %v310 = vmul.f32 %v294, %v294
  %v311 = vmul.f32 %v295, %v295
  %v312 = vmul.f32 %v296, %v296
  %v313 = vmul.f32 %v297, %v297
  %v314 = vmul.f32 %v298, %v298
  %v315 = vmul.f32 %v299, %v299
  %v316 = vsel %vm44, %v300, 0.0
  %317 = vadd.xlane.f32.xlu0 %v316
  %v318 = vpop.xlane.xlu0 %317
  %v319 = vsel %vm44, %v301, 0.0
  %320 = vadd.xlane.f32.xlu0 %v319
  %v321 = vpop.xlane.xlu0 %320
  %v322 = vsel %vm44, %v302, 0.0
  %323 = vadd.xlane.f32.xlu0 %v322
  %v324 = vpop.xlane.xlu0 %323
  %v325 = vsel %vm44, %v303, 0.0
  %326 = vadd.xlane.f32.xlu0 %v325
  %v327 = vpop.xlane.xlu0 %326
  %v328 = vsel %vm44, %v304, 0.0
  %329 = vadd.xlane.f32.xlu0 %v328
  %v330 = vpop.xlane.xlu0 %329
  %v331 = vsel %vm44, %v305, 0.0
  %332 = vadd.xlane.f32.xlu0 %v331
  %v333 = vpop.xlane.xlu0 %332
  %v334 = vsel %vm44, %v306, 0.0
  %335 = vadd.xlane.f32.xlu0 %v334
  %v336 = vpop.xlane.xlu0 %335
  %v337 = vsel %vm44, %v307, 0.0
  %338 = vadd.xlane.f32.xlu0 %v337
  %v339 = vpop.xlane.xlu0 %338
  %v340 = vsel %vm44, %v308, 0.0
  %341 = vadd.xlane.f32.xlu0 %v340
  %v342 = vpop.xlane.xlu0 %341
  %v343 = vsel %vm44, %v309, 0.0
  %344 = vadd.xlane.f32.xlu0 %v343
  %v345 = vpop.xlane.xlu0 %344
  %v346 = vsel %vm44, %v310, 0.0
  %347 = vadd.xlane.f32.xlu0 %v346
  %v348 = vpop.xlane.xlu0 %347
  %v349 = vsel %vm44, %v311, 0.0
  %350 = vadd.xlane.f32.xlu0 %v349
  %v351 = vpop.xlane.xlu0 %350
  %v352 = vsel %vm44, %v312, 0.0
  %353 = vadd.xlane.f32.xlu0 %v352
  %v354 = vpop.xlane.xlu0 %353
  %v355 = vsel %vm44, %v313, 0.0
  %356 = vadd.xlane.f32.xlu0 %v355
  %v357 = vpop.xlane.xlu0 %356
  %v358 = vsel %vm44, %v314, 0.0
  %359 = vadd.xlane.f32.xlu0 %v358
  %v360 = vpop.xlane.xlu0 %359
  %v361 = vsel %vm44, %v315, 0.0
  %362 = vadd.xlane.f32.xlu0 %v361
  %v363 = vpop.xlane.xlu0 %362
  %v364 = vmul.f32 %v318, -0.5
  %v365 = vmul.f32 %v321, -0.5
  %v366 = vmul.f32 %v324, -0.5
  %v367 = vmul.f32 %v327, -0.5
  %v368 = vmul.f32 %v330, -0.5
  %v369 = vmul.f32 %v333, -0.5
  %v370 = vmul.f32 %v336, -0.5
  %v371 = vmul.f32 %v339, -0.5
  %v372 = vmul.f32 %v342, -0.5
  %v373 = vmul.f32 %v345, -0.5
  %v374 = vmul.f32 %v348, -0.5
  %v375 = vmul.f32 %v351, -0.5
  %v376 = vmul.f32 %v354, -0.5
  %v377 = vmul.f32 %v357, -0.5
  %v378 = vmul.f32 %v360, -0.5
  %v379 = vmul.f32 %v363, -0.5
  %v380 = vmul.f32 %v364, 1.442695
  %v381 = vpow.pop %v380
  %v382 = vmul.f32 %v365, 1.442695
  %v383 = vpow.pop %v382
  %v384 = vmul.f32 %v366, 1.442695
  %v385 = vpow.pop %v384
  %v386 = vmul.f32 %v367, 1.442695
  %v387 = vpow.pop %v386
  %v388 = vmul.f32 %v368, 1.442695
  %v389 = vpow.pop %v388
  %v390 = vmul.f32 %v369, 1.442695
  %v391 = vpow.pop %v390
  %v392 = vmul.f32 %v370, 1.442695
  %v393 = vpow.pop %v392
  %v394 = vmul.f32 %v371, 1.442695
  %v395 = vpow.pop %v394
  %v396 = vmul.f32 %v372, 1.442695
  %v397 = vpow.pop %v396
  %v398 = vmul.f32 %v373, 1.442695
  %v399 = vpow.pop %v398
  %v400 = vmul.f32 %v374, 1.442695
  %v401 = vpow.pop %v400
  %v402 = vmul.f32 %v375, 1.442695
  %v403 = vpow.pop %v402
  %v404 = vmul.f32 %v376, 1.442695
  %v405 = vpow.pop %v404
  %v406 = vmul.f32 %v377, 1.442695
  %v407 = vpow.pop %v406
  %v408 = vmul.f32 %v378, 1.442695
  %v409 = vpow.pop %v408
  %v410 = vmul.f32 %v379, 1.442695
  %v411 = vpow.pop %v410
  %v412 = vld [vmem:[%s3 + $0x1] sm:$0x1]
  %v413 = vlaneseq
  %v414 = vshrl.u32 %v413, 7
  %v415 = vsub.s32 0, %v414
  %v416 = vrot.slane %v412, %v415
  %v417 = vsub.f32 %v242, %v416
  %v418 = vsub.f32 %v243, %v416
  %v419 = vsub.f32 %v244, %v416
  %v420 = vsub.f32 %v245, %v416
  %v421 = vsub.f32 %v246, %v416
  %v422 = vsub.f32 %v247, %v416
  %v423 = vsub.f32 %v248, %v416
  %v424 = vsub.f32 %v249, %v416
  %v425 = vsub.f32 %v250, %v416
  %v426 = vsub.f32 %v251, %v416
  %v427 = vsub.f32 %v252, %v416
  %v428 = vsub.f32 %v253, %v416
  %v429 = vsub.f32 %v254, %v416
  %v430 = vsub.f32 %v255, %v416
  %v431 = vsub.f32 %v256, %v416
  %v432 = vsub.f32 %v257, %v416
  %v433 = vld [vmem:[%s4 + $0x1] sm:$0x1]
  %v434 = vlaneseq
  %v435 = vshrl.u32 %v434, 7
  %v436 = vsub.s32 0, %v435
  %v437 = vrot.slane %v433, %v436
  %v438 = vmul.f32 %v417, %v437
  %v439 = vmul.f32 %v418, %v437
  %v440 = vmul.f32 %v419, %v437
  %v441 = vmul.f32 %v420, %v437
  %v442 = vmul.f32 %v421, %v437
  %v443 = vmul.f32 %v422, %v437
  %v444 = vmul.f32 %v423, %v437
  %v445 = vmul.f32 %v424, %v437
  %v446 = vmul.f32 %v425, %v437
  %v447 = vmul.f32 %v426, %v437
  %v448 = vmul.f32 %v427, %v437
  %v449 = vmul.f32 %v428, %v437
  %v450 = vmul.f32 %v429, %v437
  %v451 = vmul.f32 %v430, %v437
  %v452 = vmul.f32 %v431, %v437
  %v453 = vmul.f32 %v432, %v437
  %v454 = vmul.f32 %v438, %v438
  %v455 = vmul.f32 %v439, %v439
  %v456 = vmul.f32 %v440, %v440
  %v457 = vmul.f32 %v441, %v441
  %v458 = vmul.f32 %v442, %v442
  %v459 = vmul.f32 %v443, %v443
  %v460 = vmul.f32 %v444, %v444
  %v461 = vmul.f32 %v445, %v445
  %v462 = vmul.f32 %v446, %v446
  %v463 = vmul.f32 %v447, %v447
  %v464 = vmul.f32 %v448, %v448
  %v465 = vmul.f32 %v449, %v449
  %v466 = vmul.f32 %v450, %v450
  %v467 = vmul.f32 %v451, %v451
  %v468 = vmul.f32 %v452, %v452
  %v469 = vmul.f32 %v453, %v453
  %v470 = vsel %vm44, %v454, 0.0
  %471 = vadd.xlane.f32.xlu0 %v470
  %v472 = vpop.xlane.xlu0 %471
  %v473 = vsel %vm44, %v455, 0.0
  %474 = vadd.xlane.f32.xlu0 %v473
  %v475 = vpop.xlane.xlu0 %474
  %v476 = vsel %vm44, %v456, 0.0
  %477 = vadd.xlane.f32.xlu0 %v476
  %v478 = vpop.xlane.xlu0 %477
  %v479 = vsel %vm44, %v457, 0.0
  %480 = vadd.xlane.f32.xlu0 %v479
  %v481 = vpop.xlane.xlu0 %480
  %v482 = vsel %vm44, %v458, 0.0
  %483 = vadd.xlane.f32.xlu0 %v482
  %v484 = vpop.xlane.xlu0 %483
  %v485 = vsel %vm44, %v459, 0.0
  %486 = vadd.xlane.f32.xlu0 %v485
  %v487 = vpop.xlane.xlu0 %486
  %v488 = vsel %vm44, %v460, 0.0
  %489 = vadd.xlane.f32.xlu0 %v488
  %v490 = vpop.xlane.xlu0 %489
  %v491 = vsel %vm44, %v461, 0.0
  %492 = vadd.xlane.f32.xlu0 %v491
  %v493 = vpop.xlane.xlu0 %492
  %v494 = vsel %vm44, %v462, 0.0
  %495 = vadd.xlane.f32.xlu0 %v494
  %v496 = vpop.xlane.xlu0 %495
  %v497 = vsel %vm44, %v463, 0.0
  %498 = vadd.xlane.f32.xlu0 %v497
  %v499 = vpop.xlane.xlu0 %498
  %v500 = vsel %vm44, %v464, 0.0
  %501 = vadd.xlane.f32.xlu0 %v500
  %v502 = vpop.xlane.xlu0 %501
  %v503 = vsel %vm44, %v465, 0.0
  %504 = vadd.xlane.f32.xlu0 %v503
  %v505 = vpop.xlane.xlu0 %504
  %v506 = vsel %vm44, %v466, 0.0
  %507 = vadd.xlane.f32.xlu0 %v506
  %v508 = vpop.xlane.xlu0 %507
  %v509 = vsel %vm44, %v467, 0.0
  %510 = vadd.xlane.f32.xlu0 %v509
  %v511 = vpop.xlane.xlu0 %510
  %v512 = vsel %vm44, %v468, 0.0
  %513 = vadd.xlane.f32.xlu0 %v512
  %v514 = vpop.xlane.xlu0 %513
  %v515 = vsel %vm44, %v469, 0.0
  %516 = vadd.xlane.f32.xlu0 %v515
  %v517 = vpop.xlane.xlu0 %516
  %v518 = vmul.f32 %v472, -0.5
  %v519 = vmul.f32 %v475, -0.5
  %v520 = vmul.f32 %v478, -0.5
  %v521 = vmul.f32 %v481, -0.5
  %v522 = vmul.f32 %v484, -0.5
  %v523 = vmul.f32 %v487, -0.5
  %v524 = vmul.f32 %v490, -0.5
  %v525 = vmul.f32 %v493, -0.5
  %v526 = vmul.f32 %v496, -0.5
  %v527 = vmul.f32 %v499, -0.5
  %v528 = vmul.f32 %v502, -0.5
  %v529 = vmul.f32 %v505, -0.5
  %v530 = vmul.f32 %v508, -0.5
  %v531 = vmul.f32 %v511, -0.5
  %v532 = vmul.f32 %v514, -0.5
  %v533 = vmul.f32 %v517, -0.5
  %v534 = vmul.f32 %v518, 1.442695
  %v535 = vpow.pop %v534
  %v536 = vmul.f32 %v519, 1.442695
  %v537 = vpow.pop %v536
  %v538 = vmul.f32 %v520, 1.442695
  %v539 = vpow.pop %v538
  %v540 = vmul.f32 %v521, 1.442695
  %v541 = vpow.pop %v540
  %v542 = vmul.f32 %v522, 1.442695
  %v543 = vpow.pop %v542
  %v544 = vmul.f32 %v523, 1.442695
  %v545 = vpow.pop %v544
  %v546 = vmul.f32 %v524, 1.442695
  %v547 = vpow.pop %v546
  %v548 = vmul.f32 %v525, 1.442695
  %v549 = vpow.pop %v548
  %v550 = vmul.f32 %v526, 1.442695
  %v551 = vpow.pop %v550
  %v552 = vmul.f32 %v527, 1.442695
  %v553 = vpow.pop %v552
  %v554 = vmul.f32 %v528, 1.442695
  %v555 = vpow.pop %v554
  %v556 = vmul.f32 %v529, 1.442695
  %v557 = vpow.pop %v556
  %v558 = vmul.f32 %v530, 1.442695
  %v559 = vpow.pop %v558
  %v560 = vmul.f32 %v531, 1.442695
  %v561 = vpow.pop %v560
  %v562 = vmul.f32 %v532, 1.442695
  %v563 = vpow.pop %v562
  %v564 = vmul.f32 %v533, 1.442695
  %v565 = vpow.pop %v564
  %v566 = vld [vmem:[%s3 + $0x2] sm:$0x1]
  %v567 = vlaneseq
  %v568 = vshrl.u32 %v567, 7
  %v569 = vsub.s32 0, %v568
  %v570 = vrot.slane %v566, %v569
  %v571 = vsub.f32 %v242, %v570
  %v572 = vsub.f32 %v243, %v570
  %v573 = vsub.f32 %v244, %v570
  %v574 = vsub.f32 %v245, %v570
  %v575 = vsub.f32 %v246, %v570
  %v576 = vsub.f32 %v247, %v570
  %v577 = vsub.f32 %v248, %v570
  %v578 = vsub.f32 %v249, %v570
  %v579 = vsub.f32 %v250, %v570
  %v580 = vsub.f32 %v251, %v570
  %v581 = vsub.f32 %v252, %v570
  %v582 = vsub.f32 %v253, %v570
  %v583 = vsub.f32 %v254, %v570
  %v584 = vsub.f32 %v255, %v570
  %v585 = vsub.f32 %v256, %v570
  %v586 = vsub.f32 %v257, %v570
  %v587 = vld [vmem:[%s4 + $0x2] sm:$0x1]
  %v588 = vlaneseq
  %v589 = vshrl.u32 %v588, 7
  %v590 = vsub.s32 0, %v589
  %v591 = vrot.slane %v587, %v590
  %v592 = vmul.f32 %v571, %v591
  %v593 = vmul.f32 %v572, %v591
  %v594 = vmul.f32 %v573, %v591
  %v595 = vmul.f32 %v574, %v591
  %v596 = vmul.f32 %v575, %v591
  %v597 = vmul.f32 %v576, %v591
  %v598 = vmul.f32 %v577, %v591
  %v599 = vmul.f32 %v578, %v591
  %v600 = vmul.f32 %v579, %v591
  %v601 = vmul.f32 %v580, %v591
  %v602 = vmul.f32 %v581, %v591
  %v603 = vmul.f32 %v582, %v591
  %v604 = vmul.f32 %v583, %v591
  %v605 = vmul.f32 %v584, %v591
  %v606 = vmul.f32 %v585, %v591
  %v607 = vmul.f32 %v586, %v591
  %v608 = vmul.f32 %v592, %v592
  %v609 = vmul.f32 %v593, %v593
  %v610 = vmul.f32 %v594, %v594
  %v611 = vmul.f32 %v595, %v595
  %v612 = vmul.f32 %v596, %v596
  %v613 = vmul.f32 %v597, %v597
  %v614 = vmul.f32 %v598, %v598
  %v615 = vmul.f32 %v599, %v599
  %v616 = vmul.f32 %v600, %v600
  %v617 = vmul.f32 %v601, %v601
  %v618 = vmul.f32 %v602, %v602
  %v619 = vmul.f32 %v603, %v603
  %v620 = vmul.f32 %v604, %v604
  %v621 = vmul.f32 %v605, %v605
  %v622 = vmul.f32 %v606, %v606
  %v623 = vmul.f32 %v607, %v607
  %v624 = vsel %vm44, %v608, 0.0
  %625 = vadd.xlane.f32.xlu0 %v624
  %v626 = vpop.xlane.xlu0 %625
  %v627 = vsel %vm44, %v609, 0.0
  %628 = vadd.xlane.f32.xlu0 %v627
  %v629 = vpop.xlane.xlu0 %628
  %v630 = vsel %vm44, %v610, 0.0
  %631 = vadd.xlane.f32.xlu0 %v630
  %v632 = vpop.xlane.xlu0 %631
  %v633 = vsel %vm44, %v611, 0.0
  %634 = vadd.xlane.f32.xlu0 %v633
  %v635 = vpop.xlane.xlu0 %634
  %v636 = vsel %vm44, %v612, 0.0
  %637 = vadd.xlane.f32.xlu0 %v636
  %v638 = vpop.xlane.xlu0 %637
  %v639 = vsel %vm44, %v613, 0.0
  %640 = vadd.xlane.f32.xlu0 %v639
  %v641 = vpop.xlane.xlu0 %640
  %v642 = vsel %vm44, %v614, 0.0
  %643 = vadd.xlane.f32.xlu0 %v642
  %v644 = vpop.xlane.xlu0 %643
  %v645 = vsel %vm44, %v615, 0.0
  %646 = vadd.xlane.f32.xlu0 %v645
  %v647 = vpop.xlane.xlu0 %646
  %v648 = vsel %vm44, %v616, 0.0
  %649 = vadd.xlane.f32.xlu0 %v648
  %v650 = vpop.xlane.xlu0 %649
  %v651 = vsel %vm44, %v617, 0.0
  %652 = vadd.xlane.f32.xlu0 %v651
  %v653 = vpop.xlane.xlu0 %652
  %v654 = vsel %vm44, %v618, 0.0
  %655 = vadd.xlane.f32.xlu0 %v654
  %v656 = vpop.xlane.xlu0 %655
  %v657 = vsel %vm44, %v619, 0.0
  %658 = vadd.xlane.f32.xlu0 %v657
  %v659 = vpop.xlane.xlu0 %658
  %v660 = vsel %vm44, %v620, 0.0
  %661 = vadd.xlane.f32.xlu0 %v660
  %v662 = vpop.xlane.xlu0 %661
  %v663 = vsel %vm44, %v621, 0.0
  %664 = vadd.xlane.f32.xlu0 %v663
  %v665 = vpop.xlane.xlu0 %664
  %v666 = vsel %vm44, %v622, 0.0
  %667 = vadd.xlane.f32.xlu0 %v666
  %v668 = vpop.xlane.xlu0 %667
  %v669 = vsel %vm44, %v623, 0.0
  %670 = vadd.xlane.f32.xlu0 %v669
  %v671 = vpop.xlane.xlu0 %670
  %v672 = vmul.f32 %v626, -0.5
  %v673 = vmul.f32 %v629, -0.5
  %v674 = vmul.f32 %v632, -0.5
  %v675 = vmul.f32 %v635, -0.5
  %v676 = vmul.f32 %v638, -0.5
  %v677 = vmul.f32 %v641, -0.5
  %v678 = vmul.f32 %v644, -0.5
  %v679 = vmul.f32 %v647, -0.5
  %v680 = vmul.f32 %v650, -0.5
  %v681 = vmul.f32 %v653, -0.5
  %v682 = vmul.f32 %v656, -0.5
  %v683 = vmul.f32 %v659, -0.5
  %v684 = vmul.f32 %v662, -0.5
  %v685 = vmul.f32 %v665, -0.5
  %v686 = vmul.f32 %v668, -0.5
  %v687 = vmul.f32 %v671, -0.5
  %v688 = vmul.f32 %v672, 1.442695
  %v689 = vpow.pop %v688
  %v690 = vmul.f32 %v673, 1.442695
  %v691 = vpow.pop %v690
  %v692 = vmul.f32 %v674, 1.442695
  %v693 = vpow.pop %v692
  %v694 = vmul.f32 %v675, 1.442695
  %v695 = vpow.pop %v694
  %v696 = vmul.f32 %v676, 1.442695
  %v697 = vpow.pop %v696
  %v698 = vmul.f32 %v677, 1.442695
  %v699 = vpow.pop %v698
  %v700 = vmul.f32 %v678, 1.442695
  %v701 = vpow.pop %v700
  %v702 = vmul.f32 %v679, 1.442695
  %v703 = vpow.pop %v702
  %v704 = vmul.f32 %v680, 1.442695
  %v705 = vpow.pop %v704
  %v706 = vmul.f32 %v681, 1.442695
  %v707 = vpow.pop %v706
  %v708 = vmul.f32 %v682, 1.442695
  %v709 = vpow.pop %v708
  %v710 = vmul.f32 %v683, 1.442695
  %v711 = vpow.pop %v710
  %v712 = vmul.f32 %v684, 1.442695
  %v713 = vpow.pop %v712
  %v714 = vmul.f32 %v685, 1.442695
  %v715 = vpow.pop %v714
  %v716 = vmul.f32 %v686, 1.442695
  %v717 = vpow.pop %v716
  %v718 = vmul.f32 %v687, 1.442695
  %v719 = vpow.pop %v718
  %720 = vst [vmem:[%s5] sm:$0xff] %v381
  %721 = vst [vmem:[%s5 + $0x8] sm:$0xff] %v535
  %722 = vst [vmem:[%s5 + $0x10] sm:$0xff] %v689
  %723 = vst [vmem:[%s5 + $0x18] sm:$0xff] %v383
  %724 = vst [vmem:[%s5 + $0x20] sm:$0xff] %v537
  %725 = vst [vmem:[%s5 + $0x28] sm:$0xff] %v691
  %726 = vst [vmem:[%s5 + $0x30] sm:$0xff] %v385
  %727 = vst [vmem:[%s5 + $0x38] sm:$0xff] %v539
  %728 = vst [vmem:[%s5 + $0x40] sm:$0xff] %v693
  %729 = vst [vmem:[%s5 + $0x48] sm:$0xff] %v387
  %730 = vst [vmem:[%s5 + $0x50] sm:$0xff] %v541
  %731 = vst [vmem:[%s5 + $0x58] sm:$0xff] %v695
  %732 = vst [vmem:[%s5 + $0x60] sm:$0xff] %v389
  %733 = vst [vmem:[%s5 + $0x68] sm:$0xff] %v543
  %734 = vst [vmem:[%s5 + $0x70] sm:$0xff] %v697
  %735 = vst [vmem:[%s5 + $0x78] sm:$0xff] %v391
  %736 = vst [vmem:[%s5 + $0x80] sm:$0xff] %v545
  %737 = vst [vmem:[%s5 + $0x88] sm:$0xff] %v699
  %738 = vst [vmem:[%s5 + $0x90] sm:$0xff] %v393
  %739 = vst [vmem:[%s5 + $0x98] sm:$0xff] %v547
  %740 = vst [vmem:[%s5 + $0xa0] sm:$0xff] %v701
  %741 = vst [vmem:[%s5 + $0xa8] sm:$0xff] %v395
  %742 = vst [vmem:[%s5 + $0xb0] sm:$0xff] %v549
  %743 = vst [vmem:[%s5 + $0xb8] sm:$0xff] %v703
  %744 = vst [vmem:[%s5 + $0xc0] sm:$0xff] %v397
  %745 = vst [vmem:[%s5 + $0xc8] sm:$0xff] %v551
  %746 = vst [vmem:[%s5 + $0xd0] sm:$0xff] %v705
  %747 = vst [vmem:[%s5 + $0xd8] sm:$0xff] %v399
  %748 = vst [vmem:[%s5 + $0xe0] sm:$0xff] %v553
  %749 = vst [vmem:[%s5 + $0xe8] sm:$0xff] %v707
  %750 = vst [vmem:[%s5 + $0xf0] sm:$0xff] %v401
  %751 = vst [vmem:[%s5 + $0xf8] sm:$0xff] %v555
  %752 = vst [vmem:[%s5 + $0x100] sm:$0xff] %v709
  %753 = vst [vmem:[%s5 + $0x108] sm:$0xff] %v403
  %754 = vst [vmem:[%s5 + $0x110] sm:$0xff] %v557
  %755 = vst [vmem:[%s5 + $0x118] sm:$0xff] %v711
  %756 = vst [vmem:[%s5 + $0x120] sm:$0xff] %v405
  %757 = vst [vmem:[%s5 + $0x128] sm:$0xff] %v559
  %758 = vst [vmem:[%s5 + $0x130] sm:$0xff] %v713
  %759 = vst [vmem:[%s5 + $0x138] sm:$0xff] %v407
  %760 = vst [vmem:[%s5 + $0x140] sm:$0xff] %v561
  %761 = vst [vmem:[%s5 + $0x148] sm:$0xff] %v715
  %762 = vst [vmem:[%s5 + $0x150] sm:$0xff] %v409
  %763 = vst [vmem:[%s5 + $0x158] sm:$0xff] %v563
  %764 = vst [vmem:[%s5 + $0x160] sm:$0xff] %v717
  %765 = vst [vmem:[%s5 + $0x168] sm:$0xff] %v411
  %766 = vst [vmem:[%s5 + $0x170] sm:$0xff] %v565
  %767 = vst [vmem:[%s5 + $0x178] sm:$0xff] %v719
  // Predicated region
  $region22: #{monet_forward.6} parent=0 // pred_check
    _
  $region23: #{monet_forward.6} parent=0 // pred_check_branch
    %769 = sbr.rel (0) target = $region25
  $region24: #{monet_forward.6} parent=0 // pred_region
    _
  $region25: #{monet_forward.6} parent=0 // pred_fallthru
    _
  // Predicated region
  $region26: #{monet_forward.6} parent=0 // pred_check
    _
  $region27: #{monet_forward.6} parent=0 // pred_check_branch
    %771 = sbr.rel (0) target = $region29
  $region28: #{monet_forward.6} parent=0 // pred_region
    _
  $region29: #{monet_forward.6} parent=0 // pred_fallthru
    _

// kernel: monet_forward.9
$region0: #{monet_forward.9}
  #allocation0 [shape = 'u32[]', space=smem, size = 0x4, offset = 0x4, fixed_abs, tag = 'smem constant byte address 0x4 - core index']
  #allocation1 [shape = 'u32[144,128]{1,0:T(1,128)}', space=vmem, size = 0x12000, scoped, tag = 'internal scratch']
  #allocation2 [shape = 'f32[8,384]{1,0:T(8,128)}', space=vmem, size = 0x3000, scoped, tag = 'scratch operand']
  %s0 = inlined_call_operand.vmem [shape: bf16[8,128], index: 0, kind: input, shape index: {}]
  %s1 = inlined_call_operand.vmem [shape: bf16[128,8], index: 1, kind: input, shape index: {}]
  %s2 = inlined_call_operand.vmem [shape: bf16[8,384], index: 2, kind: input, shape index: {}]
  %s3 = inlined_call_operand.vmem [shape: f32[128,384], index: 3, kind: input, shape index: {}]
  %s4 = inlined_call_operand.vmem [shape: f32[1,128], index: 4, kind: input, shape index: {}]
  %s5 = inlined_call_operand.vmem [shape: f32[8,128], index: 5, kind: output, shape index: {}]
  %s6 = sld [smem:[#allocation0]]
  $region38: #{monet_forward.9} parent=0
    _
  %s8 = ssub.s32 1, %s6
  %s9 = scalar_select 0, %s8, %s6
  // Predicated region
  $region2: #{monet_forward.9} parent=0 // pred_check
    _
  $region3: #{monet_forward.9} parent=0 // pred_check_branch
    %11 = sbr.rel (0) target = $region5
  $region4: #{monet_forward.9} parent=0 // pred_region
    _
  $region5: #{monet_forward.9} parent=0 // pred_fallthru
    _
  // Predicated region
  $region6: #{monet_forward.9} parent=0 // pred_check
    _
  $region7: #{monet_forward.9} parent=0 // pred_check_branch
    %13 = sbr.rel (0) target = $region9
  $region8: #{monet_forward.9} parent=0 // pred_region
    _
  $region9: #{monet_forward.9} parent=0 // pred_fallthru
    _
  // Predicated region
  $region10: #{monet_forward.9} parent=0 // pred_check
    _
  $region11: #{monet_forward.9} parent=0 // pred_check_branch
    %15 = sbr.rel (0) target = $region13
  $region12: #{monet_forward.9} parent=0 // pred_region
    _
  $region13: #{monet_forward.9} parent=0 // pred_fallthru
    _
  // Predicated region
  $region14: #{monet_forward.9} parent=0 // pred_check
    _
  $region15: #{monet_forward.9} parent=0 // pred_check_branch
    %17 = sbr.rel (0) target = $region17
  $region16: #{monet_forward.9} parent=0 // pred_region
    _
  $region17: #{monet_forward.9} parent=0 // pred_fallthru
    _
  // Predicated region
  $region18: #{monet_forward.9} parent=0 // pred_check
    _
  $region19: #{monet_forward.9} parent=0 // pred_check_branch
    %19 = sbr.rel (0) target = $region21
  $region20: #{monet_forward.9} parent=0 // pred_region
    _
  $region21: #{monet_forward.9} parent=0 // pred_fallthru
    _
  %p21 = scmp.eq.s32.totalorder 0, 0
  // Predicated region
  $region22: #{monet_forward.9} parent=0 // pred_check
    %p22 = pneg %p21
  $region23: #{monet_forward.9} parent=0 // pred_check_branch
    %24 = sbr.rel (%p22) target = $region25
  $region24: #{monet_forward.9} parent=0 // pred_region
    %25 = vst [vmem:[#allocation2] sm:$0xff] 0.0
    %26 = vst [vmem:[#allocation2 + $0x8] sm:$0xff] 0.0
    %27 = vst [vmem:[#allocation2 + $0x10] sm:$0xff] 0.0
  $region25: #{monet_forward.9} parent=0 // pred_fallthru
    _
  %v28 = vld [vmem:[%s1] sm:$0xf]
  %v29 = vld [vmem:[%s1 + $0x4] sm:$0xf]
  %v30 = vld [vmem:[%s1 + $0x8] sm:$0xf]
  %v31 = vld [vmem:[%s1 + $0xc] sm:$0xf]
  %v32 = vld [vmem:[%s1 + $0x10] sm:$0xf]
  %v33 = vld [vmem:[%s1 + $0x14] sm:$0xf]
  %v34 = vld [vmem:[%s1 + $0x18] sm:$0xf]
  %v35 = vld [vmem:[%s1 + $0x1c] sm:$0xf]
  %v36 = vld [vmem:[%s1 + $0x20] sm:$0xf]
  %v37 = vld [vmem:[%s1 + $0x24] sm:$0xf]
  %v38 = vld [vmem:[%s1 + $0x28] sm:$0xf]
  %v39 = vld [vmem:[%s1 + $0x2c] sm:$0xf]
  %v40 = vld [vmem:[%s1 + $0x30] sm:$0xf]
  %v41 = vld [vmem:[%s1 + $0x34] sm:$0xf]
  %v42 = vld [vmem:[%s1 + $0x38] sm:$0xf]
  %v43 = vld [vmem:[%s1 + $0x3c] sm:$0xf]
  %v44 = vld [vmem:[%s2] sm:$0xff]
  %v45 = vld [vmem:[%s2 + $0x8] sm:$0xf]
  %v62 = vunpack.c.l.b16 %v28
  %v63 = vunpack.c.l.b16 %v29
  %v64 = vunpack.c.l.b16 %v30
  %v65 = vunpack.c.l.b16 %v31
  %v66 = vunpack.c.l.b16 %v32
  %v67 = vunpack.c.l.b16 %v33
  %v68 = vunpack.c.l.b16 %v34
  %v69 = vunpack.c.l.b16 %v35
  %v70 = vunpack.c.l.b16 %v36
  %v71 = vunpack.c.l.b16 %v37
  %v72 = vunpack.c.l.b16 %v38
  %v73 = vunpack.c.l.b16 %v39
  %v74 = vunpack.c.l.b16 %v40
  %v75 = vunpack.c.l.b16 %v41
  %v76 = vunpack.c.l.b16 %v42
  %v77 = vunpack.c.l.b16 %v43
  %v78 = vpack.c.b16 %v63, %v62
  %v79 = vpack.c.b16 %v65, %v64
  %v80 = vpack.c.b16 %v67, %v66
  %v81 = vpack.c.b16 %v69, %v68
  %v82 = vpack.c.b16 %v71, %v70
  %v83 = vpack.c.b16 %v73, %v72
  %v84 = vpack.c.b16 %v75, %v74
  %v85 = vpack.c.b16 %v77, %v76
  %v88 = vunpack.c.l.b16 %v44
  %v89 = vunpack.c.h.b16 %v44
  %v90 = vunpack.c.l.b16 %v45
  %v91 = vpack.c.b16 %v88, %v88
  %v92 = vpack.c.b16 %v89, %v89
  %v93 = vpack.c.b16 %v90, %v90
  %vm94 = vcmask 64512
  %v96 = vsel %vm94, %v78, 0
  %v99 = vsel %vm94, %v79, 0
  %v102 = vsel %vm94, %v80, 0
  %v105 = vsel %vm94, %v81, 0
  %v108 = vsel %vm94, %v82, 0
  %v111 = vsel %vm94, %v83, 0
  %v114 = vsel %vm94, %v84, 0
  %v117 = vsel %vm94, %v85, 0
  %vm119 = vcmask 1043456
  %v121 = vsel %vm119, %v91, 0
  %v124 = vsel %vm119, %v92, 0
  %v127 = vsel %vm119, %v93, 0
  %129 = vmatprep.subr.bf16.mxu0 %v124
  %130 = vmatpush1.bf16.msra.mxu0 %v121
  %131 = vmatprep.subr.bf16.mxu0 0
  %132 = vmatpush1.bf16.msra.mxu0 0
  %133 = vmatprep.subr.bf16.mxu0 0
  %134 = vmatpush1.bf16.msra.mxu0 0
  %135 = vmatprep.subr.bf16.mxu0 0
  %136 = vmatpush1.bf16.msra.mxu0 0
  %137 = vmatprep.subr.bf16.mxu0 0
  %138 = vmatpush1.bf16.msra.mxu0 0
  %139 = vmatprep.subr.bf16.mxu0 0
  %140 = vmatpush1.bf16.msra.mxu0 0
  %141 = vmatprep.subr.bf16.mxu0 0
  %142 = vmatpush1.bf16.msra.mxu0 0
  %143 = vmatprep.subr.bf16.mxu0 0
  %144 = vmatpush1.bf16.msra.mxu0 0
  %145 = vmatprep.subr.bf16.mxu0 0
  %146 = vmatpush1.bf16.msra.mxu0 0
  %147 = vmatprep.subr.bf16.mxu0 0
  %148 = vmatpush1.bf16.msra.mxu0 0
  %149 = vmatprep.subr.bf16.mxu0 0
  %150 = vmatpush1.bf16.msra.mxu0 0
  %151 = vmatprep.subr.bf16.mxu0 0
  %152 = vmatpush1.bf16.msra.mxu0 0
  %153 = vmatprep.subr.bf16.mxu0 0
  %154 = vmatpush1.bf16.msra.mxu0 0
  %155 = vmatprep.subr.bf16.mxu0 0
  %156 = vmatpush1.bf16.msra.mxu0 0
  %157 = vmatprep.subr.bf16.mxu0 0
  %158 = vmatpush1.bf16.msra.mxu0 0
  %159 = vmatprep.subr.bf16.mxu0 0
  %160 = vmatpush1.bf16.msra.mxu0 0
  %161 = vmatprep.mubr.bf16.mxu0 0
  %162 = vmatmul.mubr.bf16.gmra.mrb[0].mxu0 %v96
  %v163 = vpop.f32.mrb[0].mxu0
  %v164 = vadd.f32 0.0, %v163
  %v165 = vpop.f32.mrb[0].mxu0
  %v166 = vadd.f32 0.0, %v165
  %v167 = vpop.f32.mrb[0].mxu0
  %v168 = vadd.f32 0.0, %v167
  %v169 = vpop.f32.mrb[0].mxu0
  %v170 = vadd.f32 0.0, %v169
  %171 = vmatprep.mubr.bf16.mxu0 0
  %172 = vmatmul.mubr.bf16.gmra.mrb[0].mxu0 %v99
  %v173 = vpop.f32.mrb[0].mxu0
  %v174 = vadd.f32 0.0, %v173
  %v175 = vpop.f32.mrb[0].mxu0
  %v176 = vadd.f32 0.0, %v175
  %v177 = vpop.f32.mrb[0].mxu0
  %v178 = vadd.f32 0.0, %v177
  %v179 = vpop.f32.mrb[0].mxu0
  %v180 = vadd.f32 0.0, %v179
  %181 = vmatprep.mubr.bf16.mxu0 0
  %182 = vmatmul.mubr.bf16.gmra.mrb[0].mxu0 %v102
  %v183 = vpop.f32.mrb[0].mxu0
  %v184 = vadd.f32 0.0, %v183
  %v185 = vpop.f32.mrb[0].mxu0
  %v186 = vadd.f32 0.0, %v185
  %v187 = vpop.f32.mrb[0].mxu0
  %v188 = vadd.f32 0.0, %v187
  %v189 = vpop.f32.mrb[0].mxu0
  %v190 = vadd.f32 0.0, %v189
  %191 = vmatprep.mubr.bf16.mxu0 0
  %192 = vmatmul.mubr.bf16.gmra.mrb[0].mxu0 %v105
  %v193 = vpop.f32.mrb[0].mxu0
  %v194 = vadd.f32 0.0, %v193
  %v195 = vpop.f32.mrb[0].mxu0
  %v196 = vadd.f32 0.0, %v195
  %v197 = vpop.f32.mrb[0].mxu0
  %v198 = vadd.f32 0.0, %v197
  %v199 = vpop.f32.mrb[0].mxu0
  %v200 = vadd.f32 0.0, %v199
  %201 = vmatprep.mubr.bf16.mxu0 0
  %202 = vmatmul.mubr.bf16.gmra.mrb[0].mxu0 %v108
  %v203 = vpop.f32.mrb[0].mxu0
  %v204 = vadd.f32 0.0, %v203
  %v205 = vpop.f32.mrb[0].mxu0
  %v206 = vadd.f32 0.0, %v205
  %v207 = vpop.f32.mrb[0].mxu0
  %v208 = vadd.f32 0.0, %v207
  %v209 = vpop.f32.mrb[0].mxu0
  %v210 = vadd.f32 0.0, %v209
  %211 = vmatprep.mubr.bf16.mxu0 0
  %212 = vmatmul.mubr.bf16.gmra.mrb[0].mxu0 %v111
  %v213 = vpop.f32.mrb[0].mxu0
  %v214 = vadd.f32 0.0, %v213
  %v215 = vpop.f32.mrb[0].mxu0
  %v216 = vadd.f32 0.0, %v215
  %v217 = vpop.f32.mrb[0].mxu0
  %v218 = vadd.f32 0.0, %v217
  %v219 = vpop.f32.mrb[0].mxu0
  %v220 = vadd.f32 0.0, %v219
  %221 = vmatprep.mubr.bf16.mxu0 0
  %222 = vmatmul.mubr.bf16.gmra.mrb[0].mxu0 %v114
  %v223 = vpop.f32.mrb[0].mxu0
  %v224 = vadd.f32 0.0, %v223
  %v225 = vpop.f32.mrb[0].mxu0
  %v226 = vadd.f32 0.0, %v225
  %v227 = vpop.f32.mrb[0].mxu0
  %v228 = vadd.f32 0.0, %v227
  %v229 = vpop.f32.mrb[0].mxu0
  %v230 = vadd.f32 0.0, %v229
  %231 = vmatprep.mubr.bf16.mxu0 0
  %232 = vmatmul.mubr.bf16.gmra.mrb[0].mxu0 %v117
  %v233 = vpop.f32.mrb[0].mxu0
  %v234 = vadd.f32 0.0, %v233
  %v235 = vpop.f32.mrb[0].mxu0
  %v236 = vadd.f32 0.0, %v235
  %v237 = vpop.f32.mrb[0].mxu0
  %v238 = vadd.f32 0.0, %v237
  %v239 = vpop.f32.mrb[0].mxu0
  %v240 = vadd.f32 0.0, %v239
  %241 = vdwg.mxu0
  %242 = vmatprep.subr.bf16.mxu0 0
  %243 = vmatpush1.bf16.msra.mxu0 %v127
  %244 = vmatprep.subr.bf16.mxu0 0
  %245 = vmatpush1.bf16.msra.mxu0 0
  %246 = vmatprep.subr.bf16.mxu0 0
  %247 = vmatpush1.bf16.msra.mxu0 0
  %248 = vmatprep.subr.bf16.mxu0 0
  %249 = vmatpush1.bf16.msra.mxu0 0
  %250 = vmatprep.subr.bf16.mxu0 0
  %251 = vmatpush1.bf16.msra.mxu0 0
  %252 = vmatprep.subr.bf16.mxu0 0
  %253 = vmatpush1.bf16.msra.mxu0 0
  %254 = vmatprep.subr.bf16.mxu0 0
  %255 = vmatpush1.bf16.msra.mxu0 0
  %256 = vmatprep.subr.bf16.mxu0 0
  %257 = vmatpush1.bf16.msra.mxu0 0
  %258 = vmatprep.subr.bf16.mxu0 0
  %259 = vmatpush1.bf16.msra.mxu0 0
  %260 = vmatprep.subr.bf16.mxu0 0
  %261 = vmatpush1.bf16.msra.mxu0 0
  %262 = vmatprep.subr.bf16.mxu0 0
  %263 = vmatpush1.bf16.msra.mxu0 0
  %264 = vmatprep.subr.bf16.mxu0 0
  %265 = vmatpush1.bf16.msra.mxu0 0
  %266 = vmatprep.subr.bf16.mxu0 0
  %267 = vmatpush1.bf16.msra.mxu0 0
  %268 = vmatprep.subr.bf16.mxu0 0
  %269 = vmatpush1.bf16.msra.mxu0 0
  %270 = vmatprep.subr.bf16.mxu0 0
  %271 = vmatpush1.bf16.msra.mxu0 0
  %272 = vmatprep.subr.bf16.mxu0 0
  %273 = vmatpush1.bf16.msra.mxu0 0
  %274 = vmatprep.mubr.bf16.mxu0 0
  %275 = vmatmul.mubr.bf16.gmra.mrb[0].mxu0 %v96
  %v276 = vpop.f32.mrb[0].mxu0
  %v277 = vadd.f32 0.0, %v276
  %v278 = vpop.f32.mrb[0].mxu0
  %v279 = vpop.f32.mrb[0].mxu0
  %v280 = vadd.f32 0.0, %v279
  %v281 = vpop.f32.mrb[0].mxu0
  %282 = vmatprep.mubr.bf16.mxu0 0
  %283 = vmatmul.mubr.bf16.gmra.mrb[0].mxu0 %v99
  %v284 = vpop.f32.mrb[0].mxu0
  %v285 = vadd.f32 0.0, %v284
  %v286 = vpop.f32.mrb[0].mxu0
  %v287 = vpop.f32.mrb[0].mxu0
  %v288 = vadd.f32 0.0, %v287
  %v289 = vpop.f32.mrb[0].mxu0
  %290 = vmatprep.mubr.bf16.mxu0 0
  %291 = vmatmul.mubr.bf16.gmra.mrb[0].mxu0 %v102
  %v292 = vpop.f32.mrb[0].mxu0
  %v293 = vadd.f32 0.0, %v292
  %v294 = vpop.f32.mrb[0].mxu0
  %v295 = vpop.f32.mrb[0].mxu0
  %v296 = vadd.f32 0.0, %v295
  %v297 = vpop.f32.mrb[0].mxu0
  %298 = vmatprep.mubr.bf16.mxu0 0
  %299 = vmatmul.mubr.bf16.gmra.mrb[0].mxu0 %v105
  %v300 = vpop.f32.mrb[0].mxu0
  %v301 = vadd.f32 0.0, %v300
  %v302 = vpop.f32.mrb[0].mxu0
  %v303 = vpop.f32.mrb[0].mxu0
  %v304 = vadd.f32 0.0, %v303
  %v305 = vpop.f32.mrb[0].mxu0
  %306 = vmatprep.mubr.bf16.mxu0 0
  %307 = vmatmul.mubr.bf16.gmra.mrb[0].mxu0 %v108
  %v308 = vpop.f32.mrb[0].mxu0
  %v309 = vadd.f32 0.0, %v308
  %v310 = vpop.f32.mrb[0].mxu0
  %v311 = vpop.f32.mrb[0].mxu0
  %v312 = vadd.f32 0.0, %v311
  %v313 = vpop.f32.mrb[0].mxu0
  %314 = vmatprep.mubr.bf16.mxu0 0
  %315 = vmatmul.mubr.bf16.gmra.mrb[0].mxu0 %v111
  %v316 = vpop.f32.mrb[0].mxu0
  %v317 = vadd.f32 0.0, %v316
  %v318 = vpop.f32.mrb[0].mxu0
  %v319 = vpop.f32.mrb[0].mxu0
  %v320 = vadd.f32 0.0, %v319
  %v321 = vpop.f32.mrb[0].mxu0
  %322 = vmatprep.mubr.bf16.mxu0 0
  %323 = vmatmul.mubr.bf16.gmra.mrb[0].mxu0 %v114
  %v324 = vpop.f32.mrb[0].mxu0
  %v325 = vadd.f32 0.0, %v324
  %v326 = vpop.f32.mrb[0].mxu0
  %v327 = vpop.f32.mrb[0].mxu0
  %v328 = vadd.f32 0.0, %v327
  %v329 = vpop.f32.mrb[0].mxu0
  %330 = vmatprep.mubr.bf16.mxu0 0
  %331 = vmatmul.mubr.bf16.gmra.mrb[0].mxu0 %v117
  %v332 = vpop.f32.mrb[0].mxu0
  %v333 = vadd.f32 0.0, %v332
  %v334 = vpop.f32.mrb[0].mxu0
  %v335 = vpop.f32.mrb[0].mxu0
  %v336 = vadd.f32 0.0, %v335
  %v337 = vpop.f32.mrb[0].mxu0
  %338 = vdwg.mxu0
  %v339 = vld [vmem:[%s3] sm:$0xff]
  %v340 = vld [vmem:[%s3 + $0x8] sm:$0xff]
  %v341 = vld [vmem:[%s3 + $0x10] sm:$0xff]
  %v342 = vld [vmem:[%s3 + $0x18] sm:$0xff]
  %v343 = vld [vmem:[%s3 + $0x20] sm:$0xff]
  %v344 = vld [vmem:[%s3 + $0x28] sm:$0xff]
  %v345 = vld [vmem:[%s3 + $0x30] sm:$0xff]
  %v346 = vld [vmem:[%s3 + $0x38] sm:$0xff]
  %v347 = vld [vmem:[%s3 + $0x40] sm:$0xff]
  %v348 = vld [vmem:[%s3 + $0x48] sm:$0xff]
  %v349 = vld [vmem:[%s3 + $0x50] sm:$0xff]
  %v350 = vld [vmem:[%s3 + $0x58] sm:$0xff]
  %v351 = vld [vmem:[%s3 + $0x60] sm:$0xff]
  %v352 = vld [vmem:[%s3 + $0x68] sm:$0xff]
  %v353 = vld [vmem:[%s3 + $0x70] sm:$0xff]
  %v354 = vld [vmem:[%s3 + $0x78] sm:$0xff]
  %v355 = vld [vmem:[%s3 + $0x80] sm:$0xff]
  %v356 = vld [vmem:[%s3 + $0x88] sm:$0xff]
  %v357 = vld [vmem:[%s3 + $0x90] sm:$0xff]
  %v358 = vld [vmem:[%s3 + $0x98] sm:$0xff]
  %v359 = vld [vmem:[%s3 + $0xa0] sm:$0xff]
  %v360 = vld [vmem:[%s3 + $0xa8] sm:$0xff]
  %v361 = vld [vmem:[%s3 + $0xb0] sm:$0xff]
  %v362 = vld [vmem:[%s3 + $0xb8] sm:$0xff]
  %v363 = vld [vmem:[%s3 + $0xc0] sm:$0xff]
  %v364 = vld [vmem:[%s3 + $0xc8] sm:$0xff]
  %v365 = vld [vmem:[%s3 + $0xd0] sm:$0xff]
  %v366 = vld [vmem:[%s3 + $0xd8] sm:$0xff]
  %v367 = vld [vmem:[%s3 + $0xe0] sm:$0xff]
  %v368 = vld [vmem:[%s3 + $0xe8] sm:$0xff]
  %v369 = vld [vmem:[%s3 + $0xf0] sm:$0xff]
  %v370 = vld [vmem:[%s3 + $0xf8] sm:$0xff]
  %v371 = vld [vmem:[%s3 + $0x100] sm:$0xff]
  %v372 = vld [vmem:[%s3 + $0x108] sm:$0xff]
  %v373 = vld [vmem:[%s3 + $0x110] sm:$0xff]
  %v374 = vld [vmem:[%s3 + $0x118] sm:$0xff]
  %v375 = vld [vmem:[%s3 + $0x120] sm:$0xff]
  %v376 = vld [vmem:[%s3 + $0x128] sm:$0xff]
  %v377 = vld [vmem:[%s3 + $0x130] sm:$0xff]
  %v378 = vld [vmem:[%s3 + $0x138] sm:$0xff]
  %v379 = vld [vmem:[%s3 + $0x140] sm:$0xff]
  %v380 = vld [vmem:[%s3 + $0x148] sm:$0xff]
  %v381 = vld [vmem:[%s3 + $0x150] sm:$0xff]
  %v382 = vld [vmem:[%s3 + $0x158] sm:$0xff]
  %v383 = vld [vmem:[%s3 + $0x160] sm:$0xff]
  %v384 = vld [vmem:[%s3 + $0x168] sm:$0xff]
  %v385 = vld [vmem:[%s3 + $0x170] sm:$0xff]
  %v386 = vld [vmem:[%s3 + $0x178] sm:$0xff]
  %v387 = vmul.f32 %v164, %v339
  %v388 = vmul.f32 %v166, %v340
  %v389 = vmul.f32 %v277, %v341
  %v390 = vmul.f32 %v168, %v342
  %v391 = vmul.f32 %v170, %v343
  %v392 = vmul.f32 %v280, %v344
  %v393 = vmul.f32 %v174, %v345
  %v394 = vmul.f32 %v176, %v346
  %v395 = vmul.f32 %v285, %v347
  %v396 = vmul.f32 %v178, %v348
  %v397 = vmul.f32 %v180, %v349
  %v398 = vmul.f32 %v288, %v350
  %v399 = vmul.f32 %v184, %v351
  %v400 = vmul.f32 %v186, %v352
  %v401 = vmul.f32 %v293, %v353
  %v402 = vmul.f32 %v188, %v354
  %v403 = vmul.f32 %v190, %v355
  %v404 = vmul.f32 %v296, %v356
  %v405 = vmul.f32 %v194, %v357
  %v406 = vmul.f32 %v196, %v358
  %v407 = vmul.f32 %v301, %v359
  %v408 = vmul.f32 %v198, %v360
  %v409 = vmul.f32 %v200, %v361
  %v410 = vmul.f32 %v304, %v362
  %v411 = vmul.f32 %v204, %v363
  %v412 = vmul.f32 %v206, %v364
  %v413 = vmul.f32 %v309, %v365
  %v414 = vmul.f32 %v208, %v366
  %v415 = vmul.f32 %v210, %v367
  %v416 = vmul.f32 %v312, %v368
  %v417 = vmul.f32 %v214, %v369
  %v418 = vmul.f32 %v216, %v370
  %v419 = vmul.f32 %v317, %v371
  %v420 = vmul.f32 %v218, %v372
  %v421 = vmul.f32 %v220, %v373
  %v422 = vmul.f32 %v320, %v374
  %v423 = vmul.f32 %v224, %v375
  %v424 = vmul.f32 %v226, %v376
  %v425 = vmul.f32 %v325, %v377
  %v426 = vmul.f32 %v228, %v378
  %v427 = vmul.f32 %v230, %v379
  %v428 = vmul.f32 %v328, %v380
  %v429 = vmul.f32 %v234, %v381
  %v430 = vmul.f32 %v236, %v382
  %v431 = vmul.f32 %v333, %v383
  %v432 = vmul.f32 %v238, %v384
  %v433 = vmul.f32 %v240, %v385
  %v434 = vmul.f32 %v336, %v386
  %v435 = vpack.c.bf16 %v390, %v387
  %v436 = vpack.c.bf16 %v391, %v388
  %v437 = vpack.c.bf16 %v392, %v389
  %v438 = vpack.c.bf16 %v396, %v393
  %v439 = vpack.c.bf16 %v397, %v394
  %v440 = vpack.c.bf16 %v398, %v395
  %v441 = vpack.c.bf16 %v402, %v399
  %v442 = vpack.c.bf16 %v403, %v400
  %v443 = vpack.c.bf16 %v404, %v401
  %v444 = vpack.c.bf16 %v408, %v405
  %v445 = vpack.c.bf16 %v409, %v406
  %v446 = vpack.c.bf16 %v410, %v407
  %v447 = vpack.c.bf16 %v414, %v411
  %v448 = vpack.c.bf16 %v415, %v412
  %v449 = vpack.c.bf16 %v416, %v413
  %v450 = vpack.c.bf16 %v420, %v417
  %v451 = vpack.c.bf16 %v421, %v418
  %v452 = vpack.c.bf16 %v422, %v419
  %v453 = vpack.c.bf16 %v426, %v423
  %v454 = vpack.c.bf16 %v427, %v424
  %v455 = vpack.c.bf16 %v428, %v425
  %v456 = vpack.c.bf16 %v432, %v429
  %v457 = vpack.c.bf16 %v433, %v430
  %v458 = vpack.c.bf16 %v434, %v431
  %v459 = vld [vmem:[#allocation2] sm:$0xff]
  %v460 = vld [vmem:[#allocation2 + $0x8] sm:$0xff]
  %v461 = vld [vmem:[#allocation2 + $0x10] sm:$0xff]
  %v462 = vld [vmem:[%s0] sm:$0xf]
  %463 = vmatprep.subr.bf16.mxu0 %v436
  %464 = vmatpush1.bf16.msra.mxu0 %v435
  %465 = vmatprep.subr.bf16.mxu0 %v439
  %466 = vmatpush1.bf16.msra.mxu0 %v438
  %467 = vmatprep.subr.bf16.mxu0 %v442
  %468 = vmatpush1.bf16.msra.mxu0 %v441
  %469 = vmatprep.subr.bf16.mxu0 %v445
  %470 = vmatpush1.bf16.msra.mxu0 %v444
  %471 = vmatprep.subr.bf16.mxu0 %v448
  %472 = vmatpush1.bf16.msra.mxu0 %v447
  %473 = vmatprep.subr.bf16.mxu0 %v451
  %474 = vmatpush1.bf16.msra.mxu0 %v450
  %475 = vmatprep.subr.bf16.mxu0 %v454
  %476 = vmatpush1.bf16.msra.mxu0 %v453
  %477 = vmatprep.subr.bf16.mxu0 %v457
  %478 = vmatpush1.bf16.msra.mxu0 %v456
  %479 = vmatprep.subr.bf16.mxu0 0
  %480 = vmatpush1.bf16.msra.mxu0 0
  %481 = vmatprep.subr.bf16.mxu0 0
  %482 = vmatpush1.bf16.msra.mxu0 0
  %483 = vmatprep.subr.bf16.mxu0 0
  %484 = vmatpush1.bf16.msra.mxu0 0
  %485 = vmatprep.subr.bf16.mxu0 0
  %486 = vmatpush1.bf16.msra.mxu0 0
  %487 = vmatprep.subr.bf16.mxu0 0
  %488 = vmatpush1.bf16.msra.mxu0 0
  %489 = vmatprep.subr.bf16.mxu0 0
  %490 = vmatpush1.bf16.msra.mxu0 0
  %491 = vmatprep.subr.bf16.mxu0 0
  %492 = vmatpush1.bf16.msra.mxu0 0
  %493 = vmatprep.subr.bf16.mxu0 0
  %494 = vmatpush1.bf16.msra.mxu0 0
  %495 = vmatprep.mubr.bf16.mxu0 0
  %496 = vmatmul.mubr.bf16.gmra.mrb[0].mxu0 %v462
  %v497 = vpop.f32.mrb[0].mxu0
  %v498 = vadd.f32 0.0, %v497
  %v499 = vpop.f32.mrb[0].mxu0
  %v500 = vadd.f32 0.0, %v499
  %v501 = vpop.f32.mrb[0].mxu0
  %v502 = vpop.f32.mrb[0].mxu0
  %503 = vdwg.mxu0
  %504 = vmatprep.subr.bf16.mxu0 0
  %505 = vmatpush1.bf16.msra.mxu0 %v437
  %506 = vmatprep.subr.bf16.mxu0 0
  %507 = vmatpush1.bf16.msra.mxu0 %v440
  %508 = vmatprep.subr.bf16.mxu0 0
  %509 = vmatpush1.bf16.msra.mxu0 %v443
  %510 = vmatprep.subr.bf16.mxu0 0
  %511 = vmatpush1.bf16.msra.mxu0 %v446
  %512 = vmatprep.subr.bf16.mxu0 0
  %513 = vmatpush1.bf16.msra.mxu0 %v449
  %514 = vmatprep.subr.bf16.mxu0 0
  %515 = vmatpush1.bf16.msra.mxu0 %v452
  %516 = vmatprep.subr.bf16.mxu0 0
  %517 = vmatpush1.bf16.msra.mxu0 %v455
  %518 = vmatprep.subr.bf16.mxu0 0
  %519 = vmatpush1.bf16.msra.mxu0 %v458
  %520 = vmatprep.subr.bf16.mxu0 0
  %521 = vmatpush1.bf16.msra.mxu0 0
  %522 = vmatprep.subr.bf16.mxu0 0
  %523 = vmatpush1.bf16.msra.mxu0 0
  %524 = vmatprep.subr.bf16.mxu0 0
  %525 = vmatpush1.bf16.msra.mxu0 0
  %526 = vmatprep.subr.bf16.mxu0 0
  %527 = vmatpush1.bf16.msra.mxu0 0
  %528 = vmatprep.subr.bf16.mxu0 0
  %529 = vmatpush1.bf16.msra.mxu0 0
  %530 = vmatprep.subr.bf16.mxu0 0
  %531 = vmatpush1.bf16.msra.mxu0 0
  %532 = vmatprep.subr.bf16.mxu0 0
  %533 = vmatpush1.bf16.msra.mxu0 0
  %534 = vmatprep.subr.bf16.mxu0 0
  %535 = vmatpush1.bf16.msra.mxu0 0
  %536 = vmatprep.mubr.bf16.mxu0 0
  %537 = vmatmul.mubr.bf16.gmra.mrb[0].mxu0 %v462
  %v538 = vpop.f32.mrb[0].mxu0
  %v539 = vadd.f32 0.0, %v538
  %v540 = vpop.f32.mrb[0].mxu0
  %v541 = vpop.f32.mrb[0].mxu0
  %v542 = vpop.f32.mrb[0].mxu0
  %543 = vdwg.mxu0
  %v544 = vadd.f32 %v459, %v498
  %v545 = vadd.f32 %v460, %v500
  %v546 = vadd.f32 %v461, %v539
  %547 = vst [vmem:[#allocation2] sm:$0xff] %v544
  %548 = vst [vmem:[#allocation2 + $0x8] sm:$0xff] %v545
  %549 = vst [vmem:[#allocation2 + $0x10] sm:$0xff] %v546
  // Predicated region
  $region26: #{monet_forward.9} parent=0 // pred_check
    %p550 = pneg %p21
  $region27: #{monet_forward.9} parent=0 // pred_check_branch
    %552 = sbr.rel (%p550) target = $region29
  $region28: #{monet_forward.9} parent=0 // pred_region
    %v553 = vld [vmem:[#allocation2] sm:$0xff]
    %v554 = vld [vmem:[#allocation2 + $0x8] sm:$0xff]
    %v555 = vld [vmem:[#allocation2 + $0x10] sm:$0xff]
    %v556 = vadd.f32 %v553, %v554
    %v557 = vadd.f32 %v556, %v555
    %v558 = vld [vmem:[%s4] sm:$0x1]
    %v560 = vlaneseq
    %v561 = vshrl.u32 %v560, 7
    %v562 = vsub.s32 0, %v561
    %v563 = vrot.slane %v558, %v562
    %v565 = vadd.f32 %v557, %v563
    %566 = vst [vmem:[%s5] sm:$0xff] %v565
  $region29: #{monet_forward.9} parent=0 // pred_fallthru
    _
  // Predicated region
  $region30: #{monet_forward.9} parent=0 // pred_check
    _
  $region31: #{monet_forward.9} parent=0 // pred_check_branch
    %568 = sbr.rel (0) target = $region33
  $region32: #{monet_forward.9} parent=0 // pred_region
    _
  $region33: #{monet_forward.9} parent=0 // pred_fallthru
    _
  // Predicated region
  $region34: #{monet_forward.9} parent=0 // pred_check
    _
  $region35: #{monet_forward.9} parent=0 // pred_check_branch
    %570 = sbr.rel (0) target = $region37
  $region36: #{monet_forward.9} parent=0 // pred_region
    _
  $region37: #{monet_forward.9} parent=0 // pred_fallthru
    _

// kernel: monet_forward.10
$region0: #{monet_forward.10}
  #allocation0 [shape = 'u32[]', space=smem, size = 0x4, offset = 0x4, fixed_abs, tag = 'smem constant byte address 0x4 - core index']
  #allocation1 [shape = 'u32[144,128]{1,0:T(1,128)}', space=vmem, size = 0x12000, scoped, tag = 'internal scratch']
  %s0 = inlined_call_operand.vmem [shape: f32[8,128], index: 0, kind: input, shape index: {}]
  %s1 = inlined_call_operand.vmem [shape: bf16[128,384], index: 1, kind: input, shape index: {}]
  %s2 = inlined_call_operand.vmem [shape: bf16[8,384], index: 2, kind: output, shape index: {}]
  %s3 = sld [smem:[#allocation0]]
  $region18: #{monet_forward.10} parent=0
    _
  %s5 = ssub.s32 1, %s3
  %s6 = scalar_select 0, %s5, %s3
  // Predicated region
  $region2: #{monet_forward.10} parent=0 // pred_check
    _
  $region3: #{monet_forward.10} parent=0 // pred_check_branch
    %8 = sbr.rel (0) target = $region5
  $region4: #{monet_forward.10} parent=0 // pred_region
    _
  $region5: #{monet_forward.10} parent=0 // pred_fallthru
    _
  // Predicated region
  $region6: #{monet_forward.10} parent=0 // pred_check
    _
  $region7: #{monet_forward.10} parent=0 // pred_check_branch
    %10 = sbr.rel (0) target = $region9
  $region8: #{monet_forward.10} parent=0 // pred_region
    _
  $region9: #{monet_forward.10} parent=0 // pred_fallthru
    _
  %v12 = vld [vmem:[%s0] sm:$0xff]
  %v13 = vmax.f32 %v12, 0.0
  %v14 = vpack.c.bf16 %v13, %v13
  %v15 = vld [vmem:[%s1] sm:$0xff]
  %v16 = vld [vmem:[%s1 + $0x8] sm:$0xf]
  %v17 = vld [vmem:[%s1 + $0xc] sm:$0xff]
  %v18 = vld [vmem:[%s1 + $0x14] sm:$0xf]
  %v19 = vld [vmem:[%s1 + $0x18] sm:$0xff]
  %v20 = vld [vmem:[%s1 + $0x20] sm:$0xf]
  %v21 = vld [vmem:[%s1 + $0x24] sm:$0xff]
  %v22 = vld [vmem:[%s1 + $0x2c] sm:$0xf]
  %v23 = vld [vmem:[%s1 + $0x30] sm:$0xff]
  %v24 = vld [vmem:[%s1 + $0x38] sm:$0xf]
  %v25 = vld [vmem:[%s1 + $0x3c] sm:$0xff]
  %v26 = vld [vmem:[%s1 + $0x44] sm:$0xf]
  %v27 = vld [vmem:[%s1 + $0x48] sm:$0xff]
  %v28 = vld [vmem:[%s1 + $0x50] sm:$0xf]
  %v29 = vld [vmem:[%s1 + $0x54] sm:$0xff]
  %v30 = vld [vmem:[%s1 + $0x5c] sm:$0xf]
  %v31 = vld [vmem:[%s1 + $0x60] sm:$0xff]
  %v32 = vld [vmem:[%s1 + $0x68] sm:$0xf]
  %v33 = vld [vmem:[%s1 + $0x6c] sm:$0xff]
  %v34 = vld [vmem:[%s1 + $0x74] sm:$0xf]
  %v35 = vld [vmem:[%s1 + $0x78] sm:$0xff]
  %v36 = vld [vmem:[%s1 + $0x80] sm:$0xf]
  %v37 = vld [vmem:[%s1 + $0x84] sm:$0xff]
  %v38 = vld [vmem:[%s1 + $0x8c] sm:$0xf]
  %v39 = vld [vmem:[%s1 + $0x90] sm:$0xff]
  %v40 = vld [vmem:[%s1 + $0x98] sm:$0xf]
  %v41 = vld [vmem:[%s1 + $0x9c] sm:$0xff]
  %v42 = vld [vmem:[%s1 + $0xa4] sm:$0xf]
  %v43 = vld [vmem:[%s1 + $0xa8] sm:$0xff]
  %v44 = vld [vmem:[%s1 + $0xb0] sm:$0xf]
  %v45 = vld [vmem:[%s1 + $0xb4] sm:$0xff]
  %v46 = vld [vmem:[%s1 + $0xbc] sm:$0xf]
  %v79 = vunpack.c.l.b16 %v15
  %v80 = vunpack.c.h.b16 %v15
  %v81 = vunpack.c.l.b16 %v16
  %v82 = vunpack.c.l.b16 %v17
  %v83 = vunpack.c.h.b16 %v17
  %v84 = vunpack.c.l.b16 %v18
  %v85 = vunpack.c.l.b16 %v19
  %v86 = vunpack.c.h.b16 %v19
  %v87 = vunpack.c.l.b16 %v20
  %v88 = vunpack.c.l.b16 %v21
  %v89 = vunpack.c.h.b16 %v21
  %v90 = vunpack.c.l.b16 %v22
  %v91 = vunpack.c.l.b16 %v23
  %v92 = vunpack.c.h.b16 %v23
  %v93 = vunpack.c.l.b16 %v24
  %v94 = vunpack.c.l.b16 %v25
  %v95 = vunpack.c.h.b16 %v25
  %v96 = vunpack.c.l.b16 %v26
  %v97 = vunpack.c.l.b16 %v27
  %v98 = vunpack.c.h.b16 %v27
  %v99 = vunpack.c.l.b16 %v28
  %v100 = vunpack.c.l.b16 %v29
  %v101 = vunpack.c.h.b16 %v29
  %v102 = vunpack.c.l.b16 %v30
  %v103 = vunpack.c.l.b16 %v31
  %v104 = vunpack.c.h.b16 %v31
  %v105 = vunpack.c.l.b16 %v32
  %v106 = vunpack.c.l.b16 %v33
  %v107 = vunpack.c.h.b16 %v33
  %v108 = vunpack.c.l.b16 %v34
  %v109 = vunpack.c.l.b16 %v35
  %v110 = vunpack.c.h.b16 %v35
  %v111 = vunpack.c.l.b16 %v36
  %v112 = vunpack.c.l.b16 %v37
  %v113 = vunpack.c.h.b16 %v37
  %v114 = vunpack.c.l.b16 %v38
  %v115 = vunpack.c.l.b16 %v39
  %v116 = vunpack.c.h.b16 %v39
  %v117 = vunpack.c.l.b16 %v40
  %v118 = vunpack.c.l.b16 %v41
  %v119 = vunpack.c.h.b16 %v41
  %v120 = vunpack.c.l.b16 %v42
  %v121 = vunpack.c.l.b16 %v43
  %v122 = vunpack.c.h.b16 %v43
  %v123 = vunpack.c.l.b16 %v44
  %v124 = vunpack.c.l.b16 %v45
  %v125 = vunpack.c.h.b16 %v45
  %v126 = vunpack.c.l.b16 %v46
  %v127 = vpack.c.b16 %v82, %v79
  %v128 = vpack.c.b16 %v83, %v80
  %v129 = vpack.c.b16 %v84, %v81
  %v130 = vpack.c.b16 %v88, %v85
  %v131 = vpack.c.b16 %v89, %v86
  %v132 = vpack.c.b16 %v90, %v87
  %v133 = vpack.c.b16 %v94, %v91
  %v134 = vpack.c.b16 %v95, %v92
  %v135 = vpack.c.b16 %v96, %v93
  %v136 = vpack.c.b16 %v100, %v97
  %v137 = vpack.c.b16 %v101, %v98
  %v138 = vpack.c.b16 %v102, %v99
  %v139 = vpack.c.b16 %v106, %v103
  %v140 = vpack.c.b16 %v107, %v104
  %v141 = vpack.c.b16 %v108, %v105
  %v142 = vpack.c.b16 %v112, %v109
  %v143 = vpack.c.b16 %v113, %v110
  %v144 = vpack.c.b16 %v114, %v111
  %v145 = vpack.c.b16 %v118, %v115
  %v146 = vpack.c.b16 %v119, %v116
  %v147 = vpack.c.b16 %v120, %v117
  %v148 = vpack.c.b16 %v124, %v121
  %v149 = vpack.c.b16 %v125, %v122
  %v150 = vpack.c.b16 %v126, %v123
  %175 = vmatprep.subr.bf16.mxu0 %v128
  %176 = vmatpush1.bf16.msra.mxu0 %v127
  %177 = vmatprep.subr.bf16.mxu0 %v131
  %178 = vmatpush1.bf16.msra.mxu0 %v130
  %179 = vmatprep.subr.bf16.mxu0 %v134
  %180 = vmatpush1.bf16.msra.mxu0 %v133
  %181 = vmatprep.subr.bf16.mxu0 %v137
  %182 = vmatpush1.bf16.msra.mxu0 %v136
  %183 = vmatprep.subr.bf16.mxu0 %v140
  %184 = vmatpush1.bf16.msra.mxu0 %v139
  %185 = vmatprep.subr.bf16.mxu0 %v143
  %186 = vmatpush1.bf16.msra.mxu0 %v142
  %187 = vmatprep.subr.bf16.mxu0 %v146
  %188 = vmatpush1.bf16.msra.mxu0 %v145
  %189 = vmatprep.subr.bf16.mxu0 %v149
  %190 = vmatpush1.bf16.msra.mxu0 %v148
  %191 = vmatprep.subr.bf16.mxu0 0
  %192 = vmatpush1.bf16.msra.mxu0 0
  %193 = vmatprep.subr.bf16.mxu0 0
  %194 = vmatpush1.bf16.msra.mxu0 0
  %195 = vmatprep.subr.bf16.mxu0 0
  %196 = vmatpush1.bf16.msra.mxu0 0
  %197 = vmatprep.subr.bf16.mxu0 0
  %198 = vmatpush1.bf16.msra.mxu0 0
  %199 = vmatprep.subr.bf16.mxu0 0
  %200 = vmatpush1.bf16.msra.mxu0 0
  %201 = vmatprep.subr.bf16.mxu0 0
  %202 = vmatpush1.bf16.msra.mxu0 0
  %203 = vmatprep.subr.bf16.mxu0 0
  %204 = vmatpush1.bf16.msra.mxu0 0
  %205 = vmatprep.subr.bf16.mxu0 0
  %206 = vmatpush1.bf16.msra.mxu0 0
  %207 = vmatprep.mubr.bf16.mxu0 0
  %208 = vmatmul.mubr.bf16.gmra.mrb[0].mxu0 %v14
  %v209 = vpop.f32.mrb[0].mxu0
  %v210 = vadd.f32 0.0, %v209
  %v211 = vpop.f32.mrb[0].mxu0
  %v212 = vadd.f32 0.0, %v211
  %v213 = vpop.f32.mrb[0].mxu0
  %v214 = vpop.f32.mrb[0].mxu0
  %215 = vdwg.mxu0
  %216 = vmatprep.subr.bf16.mxu0 0
  %217 = vmatpush1.bf16.msra.mxu0 %v129
  %218 = vmatprep.subr.bf16.mxu0 0
  %219 = vmatpush1.bf16.msra.mxu0 %v132
  %220 = vmatprep.subr.bf16.mxu0 0
  %221 = vmatpush1.bf16.msra.mxu0 %v135
  %222 = vmatprep.subr.bf16.mxu0 0
  %223 = vmatpush1.bf16.msra.mxu0 %v138
  %224 = vmatprep.subr.bf16.mxu0 0
  %225 = vmatpush1.bf16.msra.mxu0 %v141
  %226 = vmatprep.subr.bf16.mxu0 0
  %227 = vmatpush1.bf16.msra.mxu0 %v144
  %228 = vmatprep.subr.bf16.mxu0 0
  %229 = vmatpush1.bf16.msra.mxu0 %v147
  %230 = vmatprep.subr.bf16.mxu0 0
  %231 = vmatpush1.bf16.msra.mxu0 %v150
  %232 = vmatprep.subr.bf16.mxu0 0
  %233 = vmatpush1.bf16.msra.mxu0 0
  %234 = vmatprep.subr.bf16.mxu0 0
  %235 = vmatpush1.bf16.msra.mxu0 0
  %236 = vmatprep.subr.bf16.mxu0 0
  %237 = vmatpush1.bf16.msra.mxu0 0
  %238 = vmatprep.subr.bf16.mxu0 0
  %239 = vmatpush1.bf16.msra.mxu0 0
  %240 = vmatprep.subr.bf16.mxu0 0
  %241 = vmatpush1.bf16.msra.mxu0 0
  %242 = vmatprep.subr.bf16.mxu0 0
  %243 = vmatpush1.bf16.msra.mxu0 0
  %244 = vmatprep.subr.bf16.mxu0 0
  %245 = vmatpush1.bf16.msra.mxu0 0
  %246 = vmatprep.subr.bf16.mxu0 0
  %247 = vmatpush1.bf16.msra.mxu0 0
  %248 = vmatprep.mubr.bf16.mxu0 0
  %249 = vmatmul.mubr.bf16.gmra.mrb[0].mxu0 %v14
  %v250 = vpop.f32.mrb[0].mxu0
  %v251 = vadd.f32 0.0, %v250
  %v252 = vpop.f32.mrb[0].mxu0
  %v253 = vpop.f32.mrb[0].mxu0
  %v254 = vpop.f32.mrb[0].mxu0
  %255 = vdwg.mxu0
  %v256 = vpack.c.bf16 %v210, %v210
  %v257 = vpack.c.bf16 %v212, %v212
  %v258 = vpack.c.bf16 %v251, %v251
  %v262 = vunpack.c.l.b16 %v256
  %v263 = vunpack.c.l.b16 %v257
  %v264 = vunpack.c.l.b16 %v258
  %v265 = vpack.c.b16 %v263, %v262
  %v266 = vpack.c.b16 %v264, %v264
  %269 = vst [vmem:[%s2] sm:$0xff] %v265
  %270 = vst [vmem:[%s2 + $0x8] sm:$0xf] %v266
  // Predicated region
  $region10: #{monet_forward.10} parent=0 // pred_check
    _
  $region11: #{monet_forward.10} parent=0 // pred_check_branch
    %272 = sbr.rel (0) target = $region13
  $region12: #{monet_forward.10} parent=0 // pred_region
    _
  $region13: #{monet_forward.10} parent=0 // pred_fallthru
    _
  // Predicated region
  $region14: #{monet_forward.10} parent=0 // pred_check
    _
  $region15: #{monet_forward.10} parent=0 // pred_check_branch
    %274 = sbr.rel (0) target = $region17
  $region16: #{monet_forward.10} parent=0 // pred_region
    _
  $region17: #{monet_forward.10} parent=0 // pred_fallthru
    _

// kernel: monet_forward.11
$region0: #{monet_forward.11}
  #allocation0 [shape = 'u32[]', space=smem, size = 0x4, offset = 0x4, fixed_abs, tag = 'smem constant byte address 0x4 - core index']
  #allocation1 [shape = 'u32[144,128]{1,0:T(1,128)}', space=vmem, size = 0x12000, scoped, tag = 'internal scratch']
  #allocation2 [shape = 'f32[8,384]{1,0:T(8,128)}', space=vmem, size = 0x3000, scoped, tag = 'scratch operand']
  %s0 = inlined_call_operand.vmem [shape: bf16[8,128], index: 0, kind: input, shape index: {}]
  %s1 = inlined_call_operand.vmem [shape: bf16[128,8], index: 1, kind: input, shape index: {}]
  %s2 = inlined_call_operand.vmem [shape: bf16[8,384], index: 2, kind: input, shape index: {}]
  %s3 = inlined_call_operand.vmem [shape: f32[128,384], index: 3, kind: input, shape index: {}]
  %s4 = inlined_call_operand.vmem [shape: f32[1,128], index: 4, kind: input, shape index: {}]
  %s5 = inlined_call_operand.vmem [shape: f32[8,128], index: 5, kind: output, shape index: {}]
  %s6 = sld [smem:[#allocation0]]
  $region38: #{monet_forward.11} parent=0
    _
  %s8 = ssub.s32 1, %s6
  %s9 = scalar_select 0, %s8, %s6
  // Predicated region
  $region2: #{monet_forward.11} parent=0 // pred_check
    _
  $region3: #{monet_forward.11} parent=0 // pred_check_branch
    %11 = sbr.rel (0) target = $region5
  $region4: #{monet_forward.11} parent=0 // pred_region
    _
  $region5: #{monet_forward.11} parent=0 // pred_fallthru
    _
  // Predicated region
  $region6: #{monet_forward.11} parent=0 // pred_check
    _
  $region7: #{monet_forward.11} parent=0 // pred_check_branch
    %13 = sbr.rel (0) target = $region9
  $region8: #{monet_forward.11} parent=0 // pred_region
    _
  $region9: #{monet_forward.11} parent=0 // pred_fallthru
    _
  // Predicated region
  $region10: #{monet_forward.11} parent=0 // pred_check
    _
  $region11: #{monet_forward.11} parent=0 // pred_check_branch
    %15 = sbr.rel (0) target = $region13
  $region12: #{monet_forward.11} parent=0 // pred_region
    _
  $region13: #{monet_forward.11} parent=0 // pred_fallthru
    _
  // Predicated region
  $region14: #{monet_forward.11} parent=0 // pred_check
    _
  $region15: #{monet_forward.11} parent=0 // pred_check_branch
    %17 = sbr.rel (0) target = $region17
  $region16: #{monet_forward.11} parent=0 // pred_region
    _
  $region17: #{monet_forward.11} parent=0 // pred_fallthru
    _
  // Predicated region
  $region18: #{monet_forward.11} parent=0 // pred_check
    _
  $region19: #{monet_forward.11} parent=0 // pred_check_branch
    %19 = sbr.rel (0) target = $region21
  $region20: #{monet_forward.11} parent=0 // pred_region
    _
  $region21: #{monet_forward.11} parent=0 // pred_fallthru
    _
  %p21 = scmp.eq.s32.totalorder 0, 0
  // Predicated region
  $region22: #{monet_forward.11} parent=0 // pred_check
    %p22 = pneg %p21
  $region23: #{monet_forward.11} parent=0 // pred_check_branch
    %24 = sbr.rel (%p22) target = $region25
  $region24: #{monet_forward.11} parent=0 // pred_region
    %25 = vst [vmem:[#allocation2] sm:$0xff] 0.0
    %26 = vst [vmem:[#allocation2 + $0x8] sm:$0xff] 0.0
    %27 = vst [vmem:[#allocation2 + $0x10] sm:$0xff] 0.0
  $region25: #{monet_forward.11} parent=0 // pred_fallthru
    _
  %v28 = vld [vmem:[%s1] sm:$0xf]
  %v29 = vld [vmem:[%s1 + $0x4] sm:$0xf]
  %v30 = vld [vmem:[%s1 + $0x8] sm:$0xf]
  %v31 = vld [vmem:[%s1 + $0xc] sm:$0xf]
  %v32 = vld [vmem:[%s1 + $0x10] sm:$0xf]
  %v33 = vld [vmem:[%s1 + $0x14] sm:$0xf]
  %v34 = vld [vmem:[%s1 + $0x18] sm:$0xf]
  %v35 = vld [vmem:[%s1 + $0x1c] sm:$0xf]
  %v36 = vld [vmem:[%s1 + $0x20] sm:$0xf]
  %v37 = vld [vmem:[%s1 + $0x24] sm:$0xf]
  %v38 = vld [vmem:[%s1 + $0x28] sm:$0xf]
  %v39 = vld [vmem:[%s1 + $0x2c] sm:$0xf]
  %v40 = vld [vmem:[%s1 + $0x30] sm:$0xf]
  %v41 = vld [vmem:[%s1 + $0x34] sm:$0xf]
  %v42 = vld [vmem:[%s1 + $0x38] sm:$0xf]
  %v43 = vld [vmem:[%s1 + $0x3c] sm:$0xf]
  %v44 = vld [vmem:[%s2] sm:$0xff]
  %v45 = vld [vmem:[%s2 + $0x8] sm:$0xf]
  %v62 = vunpack.c.l.b16 %v28
  %v63 = vunpack.c.l.b16 %v29
  %v64 = vunpack.c.l.b16 %v30
  %v65 = vunpack.c.l.b16 %v31
  %v66 = vunpack.c.l.b16 %v32
  %v67 = vunpack.c.l.b16 %v33
  %v68 = vunpack.c.l.b16 %v34
  %v69 = vunpack.c.l.b16 %v35
  %v70 = vunpack.c.l.b16 %v36
  %v71 = vunpack.c.l.b16 %v37
  %v72 = vunpack.c.l.b16 %v38
  %v73 = vunpack.c.l.b16 %v39
  %v74 = vunpack.c.l.b16 %v40
  %v75 = vunpack.c.l.b16 %v41
  %v76 = vunpack.c.l.b16 %v42
  %v77 = vunpack.c.l.b16 %v43
  %v78 = vpack.c.b16 %v63, %v62
  %v79 = vpack.c.b16 %v65, %v64
  %v80 = vpack.c.b16 %v67, %v66
  %v81 = vpack.c.b16 %v69, %v68
  %v82 = vpack.c.b16 %v71, %v70
  %v83 = vpack.c.b16 %v73, %v72
  %v84 = vpack.c.b16 %v75, %v74
  %v85 = vpack.c.b16 %v77, %v76
  %v88 = vunpack.c.l.b16 %v44
  %v89 = vunpack.c.h.b16 %v44
  %v90 = vunpack.c.l.b16 %v45
  %v91 = vpack.c.b16 %v88, %v88
  %v92 = vpack.c.b16 %v89, %v89
  %v93 = vpack.c.b16 %v90, %v90
  %vm94 = vcmask 64512
  %v96 = vsel %vm94, %v78, 0
  %v99 = vsel %vm94, %v79, 0
  %v102 = vsel %vm94, %v80, 0
  %v105 = vsel %vm94, %v81, 0
  %v108 = vsel %vm94, %v82, 0
  %v111 = vsel %vm94, %v83, 0
  %v114 = vsel %vm94, %v84, 0
  %v117 = vsel %vm94, %v85, 0
  %vm119 = vcmask 1043456
  %v121 = vsel %vm119, %v91, 0
  %v124 = vsel %vm119, %v92, 0
  %v127 = vsel %vm119, %v93, 0
  %129 = vmatprep.subr.bf16.mxu0 %v124
  %130 = vmatpush1.bf16.msra.mxu0 %v121
  %131 = vmatprep.subr.bf16.mxu0 0
  %132 = vmatpush1.bf16.msra.mxu0 0
  %133 = vmatprep.subr.bf16.mxu0 0
  %134 = vmatpush1.bf16.msra.mxu0 0
  %135 = vmatprep.subr.bf16.mxu0 0
  %136 = vmatpush1.bf16.msra.mxu0 0
  %137 = vmatprep.subr.bf16.mxu0 0
  %138 = vmatpush1.bf16.msra.mxu0 0
  %139 = vmatprep.subr.bf16.mxu0 0
  %140 = vmatpush1.bf16.msra.mxu0 0
  %141 = vmatprep.subr.bf16.mxu0 0
  %142 = vmatpush1.bf16.msra.mxu0 0
  %143 = vmatprep.subr.bf16.mxu0 0
  %144 = vmatpush1.bf16.msra.mxu0 0
  %145 = vmatprep.subr.bf16.mxu0 0
  %146 = vmatpush1.bf16.msra.mxu0 0
  %147 = vmatprep.subr.bf16.mxu0 0
  %148 = vmatpush1.bf16.msra.mxu0 0
  %149 = vmatprep.subr.bf16.mxu0 0
  %150 = vmatpush1.bf16.msra.mxu0 0
  %151 = vmatprep.subr.bf16.mxu0 0
  %152 = vmatpush1.bf16.msra.mxu0 0
  %153 = vmatprep.subr.bf16.mxu0 0
  %154 = vmatpush1.bf16.msra.mxu0 0
  %155 = vmatprep.subr.bf16.mxu0 0
  %156 = vmatpush1.bf16.msra.mxu0 0
  %157 = vmatprep.subr.bf16.mxu0 0
  %158 = vmatpush1.bf16.msra.mxu0 0
  %159 = vmatprep.subr.bf16.mxu0 0
  %160 = vmatpush1.bf16.msra.mxu0 0
  %161 = vmatprep.mubr.bf16.mxu0 0
  %162 = vmatmul.mubr.bf16.gmra.mrb[0].mxu0 %v96
  %v163 = vpop.f32.mrb[0].mxu0
  %v164 = vadd.f32 0.0, %v163
  %v165 = vpop.f32.mrb[0].mxu0
  %v166 = vadd.f32 0.0, %v165
  %v167 = vpop.f32.mrb[0].mxu0
  %v168 = vadd.f32 0.0, %v167
  %v169 = vpop.f32.mrb[0].mxu0
  %v170 = vadd.f32 0.0, %v169
  %171 = vmatprep.mubr.bf16.mxu0 0
  %172 = vmatmul.mubr.bf16.gmra.mrb[0].mxu0 %v99
  %v173 = vpop.f32.mrb[0].mxu0
  %v174 = vadd.f32 0.0, %v173
  %v175 = vpop.f32.mrb[0].mxu0
  %v176 = vadd.f32 0.0, %v175
  %v177 = vpop.f32.mrb[0].mxu0
  %v178 = vadd.f32 0.0, %v177
  %v179 = vpop.f32.mrb[0].mxu0
  %v180 = vadd.f32 0.0, %v179
  %181 = vmatprep.mubr.bf16.mxu0 0
  %182 = vmatmul.mubr.bf16.gmra.mrb[0].mxu0 %v102
  %v183 = vpop.f32.mrb[0].mxu0
  %v184 = vadd.f32 0.0, %v183
  %v185 = vpop.f32.mrb[0].mxu0
  %v186 = vadd.f32 0.0, %v185
  %v187 = vpop.f32.mrb[0].mxu0
  %v188 = vadd.f32 0.0, %v187
  %v189 = vpop.f32.mrb[0].mxu0
  %v190 = vadd.f32 0.0, %v189
  %191 = vmatprep.mubr.bf16.mxu0 0
  %192 = vmatmul.mubr.bf16.gmra.mrb[0].mxu0 %v105
  %v193 = vpop.f32.mrb[0].mxu0
  %v194 = vadd.f32 0.0, %v193
  %v195 = vpop.f32.mrb[0].mxu0
  %v196 = vadd.f32 0.0, %v195
  %v197 = vpop.f32.mrb[0].mxu0
  %v198 = vadd.f32 0.0, %v197
  %v199 = vpop.f32.mrb[0].mxu0
  %v200 = vadd.f32 0.0, %v199
  %201 = vmatprep.mubr.bf16.mxu0 0
  %202 = vmatmul.mubr.bf16.gmra.mrb[0].mxu0 %v108
  %v203 = vpop.f32.mrb[0].mxu0
  %v204 = vadd.f32 0.0, %v203
  %v205 = vpop.f32.mrb[0].mxu0
  %v206 = vadd.f32 0.0, %v205
  %v207 = vpop.f32.mrb[0].mxu0
  %v208 = vadd.f32 0.0, %v207
  %v209 = vpop.f32.mrb[0].mxu0
  %v210 = vadd.f32 0.0, %v209
  %211 = vmatprep.mubr.bf16.mxu0 0
  %212 = vmatmul.mubr.bf16.gmra.mrb[0].mxu0 %v111
  %v213 = vpop.f32.mrb[0].mxu0
  %v214 = vadd.f32 0.0, %v213
  %v215 = vpop.f32.mrb[0].mxu0
  %v216 = vadd.f32 0.0, %v215
  %v217 = vpop.f32.mrb[0].mxu0
  %v218 = vadd.f32 0.0, %v217
  %v219 = vpop.f32.mrb[0].mxu0
  %v220 = vadd.f32 0.0, %v219
  %221 = vmatprep.mubr.bf16.mxu0 0
  %222 = vmatmul.mubr.bf16.gmra.mrb[0].mxu0 %v114
  %v223 = vpop.f32.mrb[0].mxu0
  %v224 = vadd.f32 0.0, %v223
  %v225 = vpop.f32.mrb[0].mxu0
  %v226 = vadd.f32 0.0, %v225
  %v227 = vpop.f32.mrb[0].mxu0
  %v228 = vadd.f32 0.0, %v227
  %v229 = vpop.f32.mrb[0].mxu0
  %v230 = vadd.f32 0.0, %v229
  %231 = vmatprep.mubr.bf16.mxu0 0
  %232 = vmatmul.mubr.bf16.gmra.mrb[0].mxu0 %v117
  %v233 = vpop.f32.mrb[0].mxu0
  %v234 = vadd.f32 0.0, %v233
  %v235 = vpop.f32.mrb[0].mxu0
  %v236 = vadd.f32 0.0, %v235
  %v237 = vpop.f32.mrb[0].mxu0
  %v238 = vadd.f32 0.0, %v237
  %v239 = vpop.f32.mrb[0].mxu0
  %v240 = vadd.f32 0.0, %v239
  %241 = vdwg.mxu0
  %242 = vmatprep.subr.bf16.mxu0 0
  %243 = vmatpush1.bf16.msra.mxu0 %v127
  %244 = vmatprep.subr.bf16.mxu0 0
  %245 = vmatpush1.bf16.msra.mxu0 0
  %246 = vmatprep.subr.bf16.mxu0 0
  %247 = vmatpush1.bf16.msra.mxu0 0
  %248 = vmatprep.subr.bf16.mxu0 0
  %249 = vmatpush1.bf16.msra.mxu0 0
  %250 = vmatprep.subr.bf16.mxu0 0
  %251 = vmatpush1.bf16.msra.mxu0 0
  %252 = vmatprep.subr.bf16.mxu0 0
  %253 = vmatpush1.bf16.msra.mxu0 0
  %254 = vmatprep.subr.bf16.mxu0 0
  %255 = vmatpush1.bf16.msra.mxu0 0
  %256 = vmatprep.subr.bf16.mxu0 0
  %257 = vmatpush1.bf16.msra.mxu0 0
  %258 = vmatprep.subr.bf16.mxu0 0
  %259 = vmatpush1.bf16.msra.mxu0 0
  %260 = vmatprep.subr.bf16.mxu0 0
  %261 = vmatpush1.bf16.msra.mxu0 0
  %262 = vmatprep.subr.bf16.mxu0 0
  %263 = vmatpush1.bf16.msra.mxu0 0
  %264 = vmatprep.subr.bf16.mxu0 0
  %265 = vmatpush1.bf16.msra.mxu0 0
  %266 = vmatprep.subr.bf16.mxu0 0
  %267 = vmatpush1.bf16.msra.mxu0 0
  %268 = vmatprep.subr.bf16.mxu0 0
  %269 = vmatpush1.bf16.msra.mxu0 0
  %270 = vmatprep.subr.bf16.mxu0 0
  %271 = vmatpush1.bf16.msra.mxu0 0
  %272 = vmatprep.subr.bf16.mxu0 0
  %273 = vmatpush1.bf16.msra.mxu0 0
  %274 = vmatprep.mubr.bf16.mxu0 0
  %275 = vmatmul.mubr.bf16.gmra.mrb[0].mxu0 %v96
  %v276 = vpop.f32.mrb[0].mxu0
  %v277 = vadd.f32 0.0, %v276
  %v278 = vpop.f32.mrb[0].mxu0
  %v279 = vpop.f32.mrb[0].mxu0
  %v280 = vadd.f32 0.0, %v279
  %v281 = vpop.f32.mrb[0].mxu0
  %282 = vmatprep.mubr.bf16.mxu0 0
  %283 = vmatmul.mubr.bf16.gmra.mrb[0].mxu0 %v99
  %v284 = vpop.f32.mrb[0].mxu0
  %v285 = vadd.f32 0.0, %v284
  %v286 = vpop.f32.mrb[0].mxu0
  %v287 = vpop.f32.mrb[0].mxu0
  %v288 = vadd.f32 0.0, %v287
  %v289 = vpop.f32.mrb[0].mxu0
  %290 = vmatprep.mubr.bf16.mxu0 0
  %291 = vmatmul.mubr.bf16.gmra.mrb[0].mxu0 %v102
  %v292 = vpop.f32.mrb[0].mxu0
  %v293 = vadd.f32 0.0, %v292
  %v294 = vpop.f32.mrb[0].mxu0
  %v295 = vpop.f32.mrb[0].mxu0
  %v296 = vadd.f32 0.0, %v295
  %v297 = vpop.f32.mrb[0].mxu0
  %298 = vmatprep.mubr.bf16.mxu0 0
  %299 = vmatmul.mubr.bf16.gmra.mrb[0].mxu0 %v105
  %v300 = vpop.f32.mrb[0].mxu0
  %v301 = vadd.f32 0.0, %v300
  %v302 = vpop.f32.mrb[0].mxu0
  %v303 = vpop.f32.mrb[0].mxu0
  %v304 = vadd.f32 0.0, %v303
  %v305 = vpop.f32.mrb[0].mxu0
  %306 = vmatprep.mubr.bf16.mxu0 0
  %307 = vmatmul.mubr.bf16.gmra.mrb[0].mxu0 %v108
  %v308 = vpop.f32.mrb[0].mxu0
  %v309 = vadd.f32 0.0, %v308
  %v310 = vpop.f32.mrb[0].mxu0
  %v311 = vpop.f32.mrb[0].mxu0
  %v312 = vadd.f32 0.0, %v311
  %v313 = vpop.f32.mrb[0].mxu0
  %314 = vmatprep.mubr.bf16.mxu0 0
  %315 = vmatmul.mubr.bf16.gmra.mrb[0].mxu0 %v111
  %v316 = vpop.f32.mrb[0].mxu0
  %v317 = vadd.f32 0.0, %v316
  %v318 = vpop.f32.mrb[0].mxu0
  %v319 = vpop.f32.mrb[0].mxu0
  %v320 = vadd.f32 0.0, %v319
  %v321 = vpop.f32.mrb[0].mxu0
  %322 = vmatprep.mubr.bf16.mxu0 0
  %323 = vmatmul.mubr.bf16.gmra.mrb[0].mxu0 %v114
  %v324 = vpop.f32.mrb[0].mxu0
  %v325 = vadd.f32 0.0, %v324
  %v326 = vpop.f32.mrb[0].mxu0
  %v327 = vpop.f32.mrb[0].mxu0
  %v328 = vadd.f32 0.0, %v327
  %v329 = vpop.f32.mrb[0].mxu0
  %330 = vmatprep.mubr.bf16.mxu0 0
  %331 = vmatmul.mubr.bf16.gmra.mrb[0].mxu0 %v117
  %v332 = vpop.f32.mrb[0].mxu0
  %v333 = vadd.f32 0.0, %v332
  %v334 = vpop.f32.mrb[0].mxu0
  %v335 = vpop.f32.mrb[0].mxu0
  %v336 = vadd.f32 0.0, %v335
  %v337 = vpop.f32.mrb[0].mxu0
  %338 = vdwg.mxu0
  %v339 = vld [vmem:[%s3] sm:$0xff]
  %v340 = vld [vmem:[%s3 + $0x8] sm:$0xff]
  %v341 = vld [vmem:[%s3 + $0x10] sm:$0xff]
  %v342 = vld [vmem:[%s3 + $0x18] sm:$0xff]
  %v343 = vld [vmem:[%s3 + $0x20] sm:$0xff]
  %v344 = vld [vmem:[%s3 + $0x28] sm:$0xff]
  %v345 = vld [vmem:[%s3 + $0x30] sm:$0xff]
  %v346 = vld [vmem:[%s3 + $0x38] sm:$0xff]
  %v347 = vld [vmem:[%s3 + $0x40] sm:$0xff]
  %v348 = vld [vmem:[%s3 + $0x48] sm:$0xff]
  %v349 = vld [vmem:[%s3 + $0x50] sm:$0xff]
  %v350 = vld [vmem:[%s3 + $0x58] sm:$0xff]
  %v351 = vld [vmem:[%s3 + $0x60] sm:$0xff]
  %v352 = vld [vmem:[%s3 + $0x68] sm:$0xff]
  %v353 = vld [vmem:[%s3 + $0x70] sm:$0xff]
  %v354 = vld [vmem:[%s3 + $0x78] sm:$0xff]
  %v355 = vld [vmem:[%s3 + $0x80] sm:$0xff]
  %v356 = vld [vmem:[%s3 + $0x88] sm:$0xff]
  %v357 = vld [vmem:[%s3 + $0x90] sm:$0xff]
  %v358 = vld [vmem:[%s3 + $0x98] sm:$0xff]
  %v359 = vld [vmem:[%s3 + $0xa0] sm:$0xff]
  %v360 = vld [vmem:[%s3 + $0xa8] sm:$0xff]
  %v361 = vld [vmem:[%s3 + $0xb0] sm:$0xff]
  %v362 = vld [vmem:[%s3 + $0xb8] sm:$0xff]
  %v363 = vld [vmem:[%s3 + $0xc0] sm:$0xff]
  %v364 = vld [vmem:[%s3 + $0xc8] sm:$0xff]
  %v365 = vld [vmem:[%s3 + $0xd0] sm:$0xff]
  %v366 = vld [vmem:[%s3 + $0xd8] sm:$0xff]
  %v367 = vld [vmem:[%s3 + $0xe0] sm:$0xff]
  %v368 = vld [vmem:[%s3 + $0xe8] sm:$0xff]
  %v369 = vld [vmem:[%s3 + $0xf0] sm:$0xff]
  %v370 = vld [vmem:[%s3 + $0xf8] sm:$0xff]
  %v371 = vld [vmem:[%s3 + $0x100] sm:$0xff]
  %v372 = vld [vmem:[%s3 + $0x108] sm:$0xff]
  %v373 = vld [vmem:[%s3 + $0x110] sm:$0xff]
  %v374 = vld [vmem:[%s3 + $0x118] sm:$0xff]
  %v375 = vld [vmem:[%s3 + $0x120] sm:$0xff]
  %v376 = vld [vmem:[%s3 + $0x128] sm:$0xff]
  %v377 = vld [vmem:[%s3 + $0x130] sm:$0xff]
  %v378 = vld [vmem:[%s3 + $0x138] sm:$0xff]
  %v379 = vld [vmem:[%s3 + $0x140] sm:$0xff]
  %v380 = vld [vmem:[%s3 + $0x148] sm:$0xff]
  %v381 = vld [vmem:[%s3 + $0x150] sm:$0xff]
  %v382 = vld [vmem:[%s3 + $0x158] sm:$0xff]
  %v383 = vld [vmem:[%s3 + $0x160] sm:$0xff]
  %v384 = vld [vmem:[%s3 + $0x168] sm:$0xff]
  %v385 = vld [vmem:[%s3 + $0x170] sm:$0xff]
  %v386 = vld [vmem:[%s3 + $0x178] sm:$0xff]
  %v387 = vmul.f32 %v164, %v339
  %v388 = vmul.f32 %v166, %v340
  %v389 = vmul.f32 %v277, %v341
  %v390 = vmul.f32 %v168, %v342
  %v391 = vmul.f32 %v170, %v343
  %v392 = vmul.f32 %v280, %v344
  %v393 = vmul.f32 %v174, %v345
  %v394 = vmul.f32 %v176, %v346
  %v395 = vmul.f32 %v285, %v347
  %v396 = vmul.f32 %v178, %v348
  %v397 = vmul.f32 %v180, %v349
  %v398 = vmul.f32 %v288, %v350
  %v399 = vmul.f32 %v184, %v351
  %v400 = vmul.f32 %v186, %v352
  %v401 = vmul.f32 %v293, %v353
  %v402 = vmul.f32 %v188, %v354
  %v403 = vmul.f32 %v190, %v355
  %v404 = vmul.f32 %v296, %v356
  %v405 = vmul.f32 %v194, %v357
  %v406 = vmul.f32 %v196, %v358
  %v407 = vmul.f32 %v301, %v359
  %v408 = vmul.f32 %v198, %v360
  %v409 = vmul.f32 %v200, %v361
  %v410 = vmul.f32 %v304, %v362
  %v411 = vmul.f32 %v204, %v363
  %v412 = vmul.f32 %v206, %v364
  %v413 = vmul.f32 %v309, %v365
  %v414 = vmul.f32 %v208, %v366
  %v415 = vmul.f32 %v210, %v367
  %v416 = vmul.f32 %v312, %v368
  %v417 = vmul.f32 %v214, %v369
  %v418 = vmul.f32 %v216, %v370
  %v419 = vmul.f32 %v317, %v371
  %v420 = vmul.f32 %v218, %v372
  %v421 = vmul.f32 %v220, %v373
  %v422 = vmul.f32 %v320, %v374
  %v423 = vmul.f32 %v224, %v375
  %v424 = vmul.f32 %v226, %v376
  %v425 = vmul.f32 %v325, %v377
  %v426 = vmul.f32 %v228, %v378
  %v427 = vmul.f32 %v230, %v379
  %v428 = vmul.f32 %v328, %v380
  %v429 = vmul.f32 %v234, %v381
  %v430 = vmul.f32 %v236, %v382
  %v431 = vmul.f32 %v333, %v383
  %v432 = vmul.f32 %v238, %v384
  %v433 = vmul.f32 %v240, %v385
  %v434 = vmul.f32 %v336, %v386
  %v435 = vpack.c.bf16 %v390, %v387
  %v436 = vpack.c.bf16 %v391, %v388
  %v437 = vpack.c.bf16 %v392, %v389
  %v438 = vpack.c.bf16 %v396, %v393
  %v439 = vpack.c.bf16 %v397, %v394
  %v440 = vpack.c.bf16 %v398, %v395
  %v441 = vpack.c.bf16 %v402, %v399
  %v442 = vpack.c.bf16 %v403, %v400
  %v443 = vpack.c.bf16 %v404, %v401
  %v444 = vpack.c.bf16 %v408, %v405
  %v445 = vpack.c.bf16 %v409, %v406
  %v446 = vpack.c.bf16 %v410, %v407
  %v447 = vpack.c.bf16 %v414, %v411
  %v448 = vpack.c.bf16 %v415, %v412
  %v449 = vpack.c.bf16 %v416, %v413
  %v450 = vpack.c.bf16 %v420, %v417
  %v451 = vpack.c.bf16 %v421, %v418
  %v452 = vpack.c.bf16 %v422, %v419
  %v453 = vpack.c.bf16 %v426, %v423
  %v454 = vpack.c.bf16 %v427, %v424
  %v455 = vpack.c.bf16 %v428, %v425
  %v456 = vpack.c.bf16 %v432, %v429
  %v457 = vpack.c.bf16 %v433, %v430
  %v458 = vpack.c.bf16 %v434, %v431
  %v459 = vld [vmem:[#allocation2] sm:$0xff]
  %v460 = vld [vmem:[#allocation2 + $0x8] sm:$0xff]
  %v461 = vld [vmem:[#allocation2 + $0x10] sm:$0xff]
  %v462 = vld [vmem:[%s0] sm:$0xf]
  %463 = vmatprep.subr.bf16.mxu0 %v436
  %464 = vmatpush1.bf16.msra.mxu0 %v435
  %465 = vmatprep.subr.bf16.mxu0 %v439
  %466 = vmatpush1.bf16.msra.mxu0 %v438
  %467 = vmatprep.subr.bf16.mxu0 %v442
  %468 = vmatpush1.bf16.msra.mxu0 %v441
  %469 = vmatprep.subr.bf16.mxu0 %v445
  %470 = vmatpush1.bf16.msra.mxu0 %v444
  %471 = vmatprep.subr.bf16.mxu0 %v448
  %472 = vmatpush1.bf16.msra.mxu0 %v447
  %473 = vmatprep.subr.bf16.mxu0 %v451
  %474 = vmatpush1.bf16.msra.mxu0 %v450
  %475 = vmatprep.subr.bf16.mxu0 %v454
  %476 = vmatpush1.bf16.msra.mxu0 %v453
  %477 = vmatprep.subr.bf16.mxu0 %v457
  %478 = vmatpush1.bf16.msra.mxu0 %v456
  %479 = vmatprep.subr.bf16.mxu0 0
  %480 = vmatpush1.bf16.msra.mxu0 0
  %481 = vmatprep.subr.bf16.mxu0 0
  %482 = vmatpush1.bf16.msra.mxu0 0
  %483 = vmatprep.subr.bf16.mxu0 0
  %484 = vmatpush1.bf16.msra.mxu0 0
  %485 = vmatprep.subr.bf16.mxu0 0
  %486 = vmatpush1.bf16.msra.mxu0 0
  %487 = vmatprep.subr.bf16.mxu0 0
  %488 = vmatpush1.bf16.msra.mxu0 0
  %489 = vmatprep.subr.bf16.mxu0 0
  %490 = vmatpush1.bf16.msra.mxu0 0
  %491 = vmatprep.subr.bf16.mxu0 0
  %492 = vmatpush1.bf16.msra.mxu0 0
  %493 = vmatprep.subr.bf16.mxu0 0
  %494 = vmatpush1.bf16.msra.mxu0 0
  %495 = vmatprep.mubr.bf16.mxu0 0
  %496 = vmatmul.mubr.bf16.gmra.mrb[0].mxu0 %v462
  %v497 = vpop.f32.mrb[0].mxu0
  %v498 = vadd.f32 0.0, %v497
  %v499 = vpop.f32.mrb[0].mxu0
  %v500 = vadd.f32 0.0, %v499
  %v501 = vpop.f32.mrb[0].mxu0
  %v502 = vpop.f32.mrb[0].mxu0
  %503 = vdwg.mxu0
  %504 = vmatprep.subr.bf16.mxu0 0
  %505 = vmatpush1.bf16.msra.mxu0 %v437
  %506 = vmatprep.subr.bf16.mxu0 0
  %507 = vmatpush1.bf16.msra.mxu0 %v440
  %508 = vmatprep.subr.bf16.mxu0 0
  %509 = vmatpush1.bf16.msra.mxu0 %v443
  %510 = vmatprep.subr.bf16.mxu0 0
  %511 = vmatpush1.bf16.msra.mxu0 %v446
  %512 = vmatprep.subr.bf16.mxu0 0
  %513 = vmatpush1.bf16.msra.mxu0 %v449
  %514 = vmatprep.subr.bf16.mxu0 0
  %515 = vmatpush1.bf16.msra.mxu0 %v452
  %516 = vmatprep.subr.bf16.mxu0 0
  %517 = vmatpush1.bf16.msra.mxu0 %v455
  %518 = vmatprep.subr.bf16.mxu0 0
  %519 = vmatpush1.bf16.msra.mxu0 %v458
  %520 = vmatprep.subr.bf16.mxu0 0
  %521 = vmatpush1.bf16.msra.mxu0 0
  %522 = vmatprep.subr.bf16.mxu0 0
  %523 = vmatpush1.bf16.msra.mxu0 0
  %524 = vmatprep.subr.bf16.mxu0 0
  %525 = vmatpush1.bf16.msra.mxu0 0
  %526 = vmatprep.subr.bf16.mxu0 0
  %527 = vmatpush1.bf16.msra.mxu0 0
  %528 = vmatprep.subr.bf16.mxu0 0
  %529 = vmatpush1.bf16.msra.mxu0 0
  %530 = vmatprep.subr.bf16.mxu0 0
  %531 = vmatpush1.bf16.msra.mxu0 0
  %532 = vmatprep.subr.bf16.mxu0 0
  %533 = vmatpush1.bf16.msra.mxu0 0
  %534 = vmatprep.subr.bf16.mxu0 0
  %535 = vmatpush1.bf16.msra.mxu0 0
  %536 = vmatprep.mubr.bf16.mxu0 0
  %537 = vmatmul.mubr.bf16.gmra.mrb[0].mxu0 %v462
  %v538 = vpop.f32.mrb[0].mxu0
  %v539 = vadd.f32 0.0, %v538
  %v540 = vpop.f32.mrb[0].mxu0
  %v541 = vpop.f32.mrb[0].mxu0
  %v542 = vpop.f32.mrb[0].mxu0
  %543 = vdwg.mxu0
  %v544 = vadd.f32 %v459, %v498
  %v545 = vadd.f32 %v460, %v500
  %v546 = vadd.f32 %v461, %v539
  %547 = vst [vmem:[#allocation2] sm:$0xff] %v544
  %548 = vst [vmem:[#allocation2 + $0x8] sm:$0xff] %v545
  %549 = vst [vmem:[#allocation2 + $0x10] sm:$0xff] %v546
  // Predicated region
  $region26: #{monet_forward.11} parent=0 // pred_check
    %p550 = pneg %p21
  $region27: #{monet_forward.11} parent=0 // pred_check_branch
    %552 = sbr.rel (%p550) target = $region29
  $region28: #{monet_forward.11} parent=0 // pred_region
    %v553 = vld [vmem:[#allocation2] sm:$0xff]
    %v554 = vld [vmem:[#allocation2 + $0x8] sm:$0xff]
    %v555 = vld [vmem:[#allocation2 + $0x10] sm:$0xff]
    %v556 = vadd.f32 %v553, %v554
    %v557 = vadd.f32 %v556, %v555
    %v558 = vld [vmem:[%s4] sm:$0x1]
    %v560 = vlaneseq
    %v561 = vshrl.u32 %v560, 7
    %v562 = vsub.s32 0, %v561
    %v563 = vrot.slane %v558, %v562
    %v565 = vadd.f32 %v557, %v563
    %v566 = vlaneseq
    %v567 = vand.u32 %v566, 127
    %vm568 = vcmp.lt.s32.totalorder %v567, 4
    %v569 = vsel %vm568, %v565, -1e+30
    %570 = vmax.xlane.f32.xlu0 %v569
    %v571 = vpop.xlane.xlu0 %570
    %v572 = vsub.f32 %v569, %v571
    %v573 = vmul.f32 %v572, 1.442695
    %v574 = vpow.pop %v573
    %v575 = vsel %vm568, %v574, 0.0
    %576 = vadd.xlane.f32.xlu0 %v575
    %v577 = vpop.xlane.xlu0 %576
    %v578 = vlog2.pop %v577
    %v579 = vmul.f32 %v578, 0.6931472
    %v580 = vsub.f32 %v572, %v579
    %v581 = vsel %vm568, %v580, 0.0
    %582 = vst [vmem:[%s5] sm:$0xff] %v581
  $region29: #{monet_forward.11} parent=0 // pred_fallthru
    _
  // Predicated region
  $region30: #{monet_forward.11} parent=0 // pred_check
    _
  $region31: #{monet_forward.11} parent=0 // pred_check_branch
    %584 = sbr.rel (0) target = $region33
  $region32: #{monet_forward.11} parent=0 // pred_region
    _
  $region33: #{monet_forward.11} parent=0 // pred_fallthru
    _
  // Predicated region
  $region34: #{monet_forward.11} parent=0 // pred_check
    _
  $region35: #{monet_forward.11} parent=0 // pred_check_branch
    %586 = sbr.rel (0) target = $region37
  $region36: #{monet_forward.11} parent=0 // pred_region
    _
  $region37: #{monet_forward.11} parent=0 // pred_fallthru
    _

</llo_original>
